<compile_context>
chip_gen: v7x
topology: tpu7x:2x2x1
jax: 0.10.0
libtpu: 0.0.40
codegen_flags: <defaults>
</compile_context>

<pallas_src>
import functools

import jax
import jax.numpy as jnp
from jax import lax
from jax.experimental import pallas as pl
from jax.experimental.pallas import tpu as pltpu


# ----------------------------- helpers --------------------------------------

def _round_up(x, m):
    return ((x + m - 1) // m) * m


def _pick_tile(dim, pref):
    # dims are always padded to multiples of 128
    return pref if (dim >= pref and dim % pref == 0) else 128


def _pad2(m, rows, cols):
    return jnp.zeros((rows, cols), jnp.float32).at[:m.shape[0], :m.shape[1]].set(m)


_MM_COMPILER_PARAMS = pltpu.CompilerParams(
    dimension_semantics=("parallel", "parallel", "arbitrary"),
    vmem_limit_bytes=48 * 1024 * 1024,
)


# ----------------------------- kernels --------------------------------------

def _matmul_kernel(x_ref, w_ref, o_ref, acc_ref):
    """Tiled matmul, bf16 inputs, f32 accumulation in VMEM scratch."""
    k = pl.program_id(2)

    @pl.when(k == 0)
    def _():
        acc_ref[...] = jnp.zeros_like(acc_ref)

    acc_ref[...] += jnp.dot(x_ref[...], w_ref[...],
                            preferred_element_type=jnp.float32)

    @pl.when(k == pl.num_programs(2) - 1)
    def _():
        o_ref[...] = acc_ref[...].astype(o_ref.dtype)


def _sage_agg_kernel(a_ref, yn_ref, ys_ref, b_ref, o_ref, acc_ref, *, apply_relu):
    """out = act(A @ Y_neigh + Y_self + bias); epilogue fused under pl.when."""
    k = pl.program_id(2)

    @pl.when(k == 0)
    def _():
        acc_ref[...] = jnp.zeros_like(acc_ref)

    acc_ref[...] += jnp.dot(a_ref[...], yn_ref[...],
                            preferred_element_type=jnp.float32)

    @pl.when(k == pl.num_programs(2) - 1)
    def _():
        out = (acc_ref[...] + ys_ref[...].astype(jnp.float32)
               + b_ref[...].astype(jnp.float32))
        if apply_relu:
            out = jnp.maximum(out, 0.0)
        o_ref[...] = out.astype(o_ref.dtype)


def _edge_score_kernel(src_ref, dst_ref, h_ref, o_ref, prod_ref):
    """score[e] = <H[src[e]], H[dst[e]]> for one tile of edges.

    src/dst live in SMEM (scalar prefetch); H is VMEM-resident; the per-edge
    scores are emitted as a lane-dense (1, 1, TE) row.
    """
    t = pl.program_id(0)
    te = o_ref.shape[-1]

    def body(i, carry):
        e = t * te + i
        u = src_ref[e]
        v = dst_ref[e]
        hu = h_ref[pl.ds(u, 1), :]
        hv = h_ref[pl.ds(v, 1), :]
        prod_ref[pl.ds(i, 1), :] = hu * hv
        return carry

    lax.fori_loop(0, te, body, 0)

    # (8, F) x (TE, F)^T -> (8, TE): feature-sum per edge, lane-oriented.
    ones = jnp.ones((8, prod_ref.shape[1]), jnp.float32)
    scores = lax.dot_general(ones, prod_ref[...],
                             dimension_numbers=(((1,), (1,)), ((), ())),
                             preferred_element_type=jnp.float32)
    o_ref[...] = scores[0:1, :].reshape(1, 1, te)


# --------------------------- pallas wrappers ---------------------------------

def pallas_matmul(x, w, *, out_dtype=jnp.float32):
    m, k = x.shape
    k2, n = w.shape
    assert k == k2
    tm = _pick_tile(m, 256)
    tn = _pick_tile(n, 256)
    tk = _pick_tile(k, 512)
    grid = (m // tm, n // tn, k // tk)
    return pl.pallas_call(
        _matmul_kernel,
        out_shape=jax.ShapeDtypeStruct((m, n), out_dtype),
        grid_spec=pltpu.PrefetchScalarGridSpec(
            num_scalar_prefetch=0,
            grid=grid,
            in_specs=[pl.BlockSpec((tm, tk), lambda i, j, kk: (i, kk)),
                      pl.BlockSpec((tk, tn), lambda i, j, kk: (kk, j))],
            out_specs=pl.BlockSpec((tm, tn), lambda i, j, kk: (i, j)),
            scratch_shapes=[pltpu.VMEM((tm, tn), jnp.float32)]),
        compiler_params=_MM_COMPILER_PARAMS,
    )(x, w)


def pallas_sage_aggregate(a, y_neigh, y_self, bias, *, apply_relu, out_dtype):
    n_p = a.shape[0]
    f_out = y_neigh.shape[1]
    tm = _pick_tile(n_p, 256)
    tn = _pick_tile(f_out, 256)
    tk = _pick_tile(n_p, 512)
    grid = (n_p // tm, f_out // tn, n_p // tk)
    kernel = functools.partial(_sage_agg_kernel, apply_relu=apply_relu)
    return pl.pallas_call(
        kernel,
        out_shape=jax.ShapeDtypeStruct((n_p, f_out), out_dtype),
        grid_spec=pltpu.PrefetchScalarGridSpec(
            num_scalar_prefetch=0,
            grid=grid,
            in_specs=[pl.BlockSpec((tm, tk), lambda i, j, kk: (i, kk)),   # A
                      pl.BlockSpec((tk, tn), lambda i, j, kk: (kk, j)),   # X @ W_neigh
                      pl.BlockSpec((tm, tn), lambda i, j, kk: (i, j)),    # X @ W_self
                      pl.BlockSpec((1, tn), lambda i, j, kk: (0, j))],    # bias
            out_specs=pl.BlockSpec((tm, tn), lambda i, j, kk: (i, j)),
            scratch_shapes=[pltpu.VMEM((tm, tn), jnp.float32)]),
        compiler_params=_MM_COMPILER_PARAMS,
    )(a, y_neigh, y_self, bias)


def pallas_edge_scores(h, src, dst, *, tile_edges=128):
    n_p, f_p = h.shape
    e = src.shape[0]
    e_pad = _round_up(max(e, 1), tile_edges)
    src_p = jnp.zeros((e_pad,), jnp.int32).at[:e].set(src.astype(jnp.int32))
    dst_p = jnp.zeros((e_pad,), jnp.int32).at[:e].set(dst.astype(jnp.int32))
    n_tiles = e_pad // tile_edges
    out = pl.pallas_call(
        _edge_score_kernel,
        out_shape=jax.ShapeDtypeStruct((n_tiles, 1, tile_edges), jnp.float32),
        grid_spec=pltpu.PrefetchScalarGridSpec(
            num_scalar_prefetch=2,
            grid=(n_tiles,),
            in_specs=[pl.BlockSpec((n_p, f_p), lambda t, s, d: (0, 0))],
            out_specs=pl.BlockSpec((1, 1, tile_edges), lambda t, s, d: (t, 0, 0)),
            scratch_shapes=[pltpu.VMEM((tile_edges, f_p), jnp.float32)]),
        compiler_params=pltpu.CompilerParams(
            dimension_semantics=("parallel",),
            vmem_limit_bytes=48 * 1024 * 1024),
    )(src_p, dst_p, h)
    return out.reshape(e_pad, 1)[:e]


# --------------------------- model (forward) ---------------------------------

def mean_adjacency(src, dst, n_pad):
    """A[v, u] = 1/in_deg(v) for edge u->v, 0 otherwise (guarded for deg 0)."""
    a = jnp.zeros((n_pad, n_pad), jnp.float32)
    a = a.at[dst.astype(jnp.int32), src.astype(jnp.int32)].add(1.0)
    deg = jnp.sum(a, axis=1, keepdims=True)
    inv = jnp.where(deg > 0, 1.0 / jnp.maximum(deg, 1.0), 0.0)
    return (a * inv).astype(jnp.bfloat16)


def sage_layer(a_bf16, x_bf16, w_self, w_neigh, bias, *, apply_relu, out_dtype):
    f_out_p = w_self.shape[1]
    w_cat = jnp.concatenate([w_self, w_neigh], axis=1).astype(jnp.bfloat16)
    y = pallas_matmul(x_bf16, w_cat, out_dtype=jnp.float32)      # [N_p, 2*F_out_p]
    y_self = y[:, :f_out_p]
    y_neigh = y[:, f_out_p:].astype(jnp.bfloat16)
    return pallas_sage_aggregate(a_bf16, y_neigh, y_self, bias,
                                 apply_relu=apply_relu, out_dtype=out_dtype)


def graphsage_link_predictor(x, pos_src, pos_dst, neg_src, neg_dst, params):
    w_s1, w_n1, b1, w_s2, w_n2, b2 = params
    n, f_in = x.shape
    hid = w_s1.shape[1]
    f_out = w_s2.shape[1]

    n_p = _round_up(n, 128)
    f_in_p = _round_up(f_in, 128)
    hid_p = _round_up(hid, 128)
    f_out_p = _round_up(f_out, 128)

    x_p = jnp.zeros((n_p, f_in_p), jnp.float32).at[:n, :f_in].set(x)
    a = mean_adjacency(pos_src, pos_dst, n_p)

    w_s1_p = _pad2(w_s1, f_in_p, hid_p)
    w_n1_p = _pad2(w_n1, f_in_p, hid_p)
    b1_p = jnp.zeros((1, hid_p), jnp.float32).at[0, :hid].set(b1)
    w_s2_p = _pad2(w_s2, hid_p, f_out_p)
    w_n2_p = _pad2(w_n2, hid_p, f_out_p)
    b2_p = jnp.zeros((1, f_out_p), jnp.float32).at[0, :f_out].set(b2)

    h1 = sage_layer(a, x_p.astype(jnp.bfloat16), w_s1_p, w_n1_p, b1_p,
                    apply_relu=True, out_dtype=jnp.bfloat16)
    h2 = sage_layer(a, h1, w_s2_p, w_n2_p, b2_p,
                    apply_relu=False, out_dtype=jnp.float32)

    pos = pallas_edge_scores(h2, pos_src, pos_dst)
    neg = pallas_edge_scores(h2, neg_src, neg_dst)
    return pos, neg


# ------------------------------ reference ------------------------------------

def reference_forward(x, pos_src, pos_dst, neg_src, neg_dst, params):
    w_s1, w_n1, b1, w_s2, w_n2, b2 = params
    n = x.shape[0]
    a = jnp.zeros((n, n), jnp.float32).at[pos_dst, pos_src].add(1.0)
    deg = a.sum(axis=1, keepdims=True)
    a = a * jnp.where(deg > 0, 1.0 / jnp.maximum(deg, 1.0), 0.0)
    h = x @ w_s1 + (a @ x) @ w_n1 + b1
    h = jnp.maximum(h, 0.0)
    h = h @ w_s2 + (a @ h) @ w_n2 + b2
    pos = jnp.sum(h[pos_src] * h[pos_dst], axis=-1, keepdims=True)
    neg = jnp.sum(h[neg_src] * h[neg_dst], axis=-1, keepdims=True)
    return pos, neg


# -------------------------------- main ----------------------------------------

if __name__ == "__main__":
    key = jax.random.PRNGKey(0)
    n_nodes, in_feats, hid_feats, out_feats = 32, 16, 32, 16
    n_pos, n_neg = 48, 48

    ks = jax.random.split(key, 11)
    x = jax.random.normal(ks[0], (n_nodes, in_feats), jnp.float32)
    pos_src = jax.random.randint(ks[1], (n_pos,), 0, n_nodes, jnp.int32)
    pos_dst = jax.random.randint(ks[2], (n_pos,), 0, n_nodes, jnp.int32)
    neg_src = jax.random.randint(ks[3], (n_neg,), 0, n_nodes, jnp.int32)
    neg_dst = jax.random.randint(ks[4], (n_neg,), 0, n_nodes, jnp.int32)

    w_s1 = 0.2 * jax.random.normal(ks[5], (in_feats, hid_feats), jnp.float32)
    w_n1 = 0.2 * jax.random.normal(ks[6], (in_feats, hid_feats), jnp.float32)
    b1 = 0.1 * jax.random.normal(ks[7], (hid_feats,), jnp.float32)
    w_s2 = 0.2 * jax.random.normal(ks[8], (hid_feats, out_feats), jnp.float32)
    w_n2 = 0.2 * jax.random.normal(ks[9], (hid_feats, out_feats), jnp.float32)
    b2 = 0.1 * jax.random.normal(ks[10], (out_feats,), jnp.float32)
    params = (w_s1, w_n1, b1, w_s2, w_n2, b2)

    fwd = jax.jit(graphsage_link_predictor)
    pos, neg = fwd(x, pos_src, pos_dst, neg_src, neg_dst, params)
    pos.block_until_ready()
    neg.block_until_ready()

    pos_ref, neg_ref = reference_forward(x, pos_src, pos_dst, neg_src, neg_dst,
                                         params)
    scale = float(jnp.max(jnp.abs(jnp.concatenate([pos_ref, neg_ref])))) + 1.0
    err = float(jnp.max(jnp.abs(jnp.concatenate([pos - pos_ref, neg - neg_ref]))))
    finite = bool(jnp.all(jnp.isfinite(pos)) & jnp.all(jnp.isfinite(neg)))
    if (not finite) or err > 0.05 * scale:
        raise AssertionError(f"kernel vs reference mismatch: max_err={err}, "
                             f"scale={scale}, finite={finite}")
    print("KERNEL_OK")
</pallas_src>

<mosaic_0001>
module attributes {stable_mosaic.version = 11 : i64} {
  func.func private @main(%arg0: i32) attributes {dimension_semantics = [#tpu.dimension_semantics<core_parallel>], iteration_bounds = array<i64: 2>, tpu.core_type = #tpu.core_type<sc_scalar_subcore>, window_params = []} {
    return
  }
}

module attributes {stable_mosaic.version = 11 : i64} {
  func.func private @main(%arg0: i32) attributes {dimension_semantics = [#tpu.dimension_semantics<core_parallel>], iteration_bounds = array<i64: 2>, tpu.core_type = #tpu.core_type<sc_scalar_subcore>, window_params = []} {
    return
  }
}

module attributes {stable_mosaic.version = 11 : i64} {
  func.func @_matmul_kernel(%arg0: i32, %arg1: i32, %arg2: i32, %arg3: memref<128x128xbf16, #tpu.memory_space<vmem>>, %arg4: memref<128x256xbf16, #tpu.memory_space<vmem>>, %arg5: memref<128x256xf32, #tpu.memory_space<vmem>>, %arg6: memref<128x256xf32, #tpu.memory_space<vmem>>) attributes {dimension_semantics = [#tpu.dimension_semantics<parallel>, #tpu.dimension_semantics<parallel>, #tpu.dimension_semantics<arbitrary>], iteration_bounds = array<i64: 1, 1, 1>, scalar_prefetch = 0 : i64, scratch_operands = 1 : i64, tpu.core_type = #tpu.core_type<tc>, window_params = [{transform_indices = @transform_0, window_bounds = array<i64: 128, 128>}, {transform_indices = @transform_1, window_bounds = array<i64: 128, 256>}, {transform_indices = @transform_2, window_bounds = array<i64: 128, 256>}]} {
    %c0_i32 = arith.constant 0 : i32
    %0 = arith.cmpi eq, %arg2, %c0_i32 : i32
    %1 = arith.extui %0 : i1 to i32
    %c0_i32_0 = arith.constant 0 : i32
    %2 = arith.cmpi ne, %1, %c0_i32_0 : i32
    scf.if %2 {
      %cst_10 = arith.constant 0.000000e+00 : f32
      %12 = vector.broadcast %cst_10 : f32 to vector<128x256xf32>
      %c0_11 = arith.constant 0 : index
      %c0_12 = arith.constant 0 : index
      %13 = vector.load %arg6[%c0_11, %c0_12] : memref<128x256xf32, #tpu.memory_space<vmem>>, vector<128x256xf32>
      tpu.vector_store %arg6[%c0_11, %c0_12], %12 {strides = array<i32>} : memref<128x256xf32, #tpu.memory_space<vmem>>, vector<128x256xf32>,
    } else {
    }
    %c0 = arith.constant 0 : index
    %c0_1 = arith.constant 0 : index
    %3 = vector.load %arg6[%c0, %c0_1] : memref<128x256xf32, #tpu.memory_space<vmem>>, vector<128x256xf32>
    %c0_2 = arith.constant 0 : index
    %c0_3 = arith.constant 0 : index
    %4 = vector.load %arg3[%c0_2, %c0_3] : memref<128x128xbf16, #tpu.memory_space<vmem>>, vector<128x128xbf16>
    %c0_4 = arith.constant 0 : index
    %c0_5 = arith.constant 0 : index
    %5 = vector.load %arg4[%c0_4, %c0_5] : memref<128x256xbf16, #tpu.memory_space<vmem>>, vector<128x256xbf16>
    %cst = arith.constant dense<0.000000e+00> : vector<128x256xf32>
    %6 = tpu.matmul %4, %5, %cst {dimension_numbers = #tpu.dot_dimension_numbers<[1], [0], [0], [1], [0, 0, 1, 1], [], []>} : vector<128x128xbf16>, vector<128x256xbf16>, vector<128x256xf32> -> vector<128x256xf32>
    %7 = arith.addf %3, %6 : vector<128x256xf32>
    %c0_6 = arith.constant 0 : index
    %c0_7 = arith.constant 0 : index
    %8 = vector.load %arg6[%c0_6, %c0_7] : memref<128x256xf32, #tpu.memory_space<vmem>>, vector<128x256xf32>
    tpu.vector_store %arg6[%c0_6, %c0_7], %7 {strides = array<i32>} : memref<128x256xf32, #tpu.memory_space<vmem>>, vector<128x256xf32>,
    %c0_i32_8 = arith.constant 0 : i32
    %9 = arith.cmpi eq, %arg2, %c0_i32_8 : i32
    %10 = arith.extui %9 : i1 to i32
    %c0_i32_9 = arith.constant 0 : i32
    %11 = arith.cmpi ne, %10, %c0_i32_9 : i32
    scf.if %11 {
      %c0_10 = arith.constant 0 : index
      %c0_11 = arith.constant 0 : index
      %12 = vector.load %arg6[%c0_10, %c0_11] : memref<128x256xf32, #tpu.memory_space<vmem>>, vector<128x256xf32>
      %c0_12 = arith.constant 0 : index
      %c0_13 = arith.constant 0 : index
      %13 = vector.load %arg5[%c0_12, %c0_13] : memref<128x256xf32, #tpu.memory_space<vmem>>, vector<128x256xf32>
      tpu.vector_store %arg5[%c0_12, %c0_13], %12 {strides = array<i32>} : memref<128x256xf32, #tpu.memory_space<vmem>>, vector<128x256xf32>,
    } else {
    }
    return
  }
  func.func @transform_0(%arg0: i32, %arg1: i32, %arg2: i32) -> (i32, i32) {
    %c0_i32 = arith.constant 0 : i32
    return %arg0, %arg2 : i32, i32
  }
  func.func @transform_1(%arg0: i32, %arg1: i32, %arg2: i32) -> (i32, i32) {
    %c0_i32 = arith.constant 0 : i32
    return %arg2, %arg1 : i32, i32
  }
  func.func @transform_2(%arg0: i32, %arg1: i32, %arg2: i32) -> (i32, i32) {
    %c0_i32 = arith.constant 0 : i32
    return %arg0, %arg1 : i32, i32
  }
}

module attributes {stable_mosaic.version = 11 : i64} {
  func.func @_sage_agg_kernel(%arg0: i32, %arg1: i32, %arg2: i32, %arg3: memref<128x128xbf16, #tpu.memory_space<vmem>>, %arg4: memref<128x128xbf16, #tpu.memory_space<vmem>>, %arg5: memref<128x128xf32, #tpu.memory_space<vmem>>, %arg6: memref<1x128xf32, #tpu.memory_space<vmem>>, %arg7: memref<128x128xbf16, #tpu.memory_space<vmem>>, %arg8: memref<128x128xf32, #tpu.memory_space<vmem>>) attributes {dimension_semantics = [#tpu.dimension_semantics<parallel>, #tpu.dimension_semantics<parallel>, #tpu.dimension_semantics<arbitrary>], iteration_bounds = array<i64: 1, 1, 1>, scalar_prefetch = 0 : i64, scratch_operands = 1 : i64, tpu.core_type = #tpu.core_type<tc>, window_params = [{transform_indices = @transform_0, window_bounds = array<i64: 128, 128>}, {transform_indices = @transform_1, window_bounds = array<i64: 128, 128>}, {transform_indices = @transform_2, window_bounds = array<i64: 128, 128>}, {transform_indices = @transform_3, window_bounds = array<i64: 1, 128>}, {transform_indices = @transform_4, window_bounds = array<i64: 128, 128>}]} {
    %c0_i32 = arith.constant 0 : i32
    %0 = arith.cmpi eq, %arg2, %c0_i32 : i32
    %1 = arith.extui %0 : i1 to i32
    %c0_i32_0 = arith.constant 0 : i32
    %2 = arith.cmpi ne, %1, %c0_i32_0 : i32
    scf.if %2 {
      %cst_10 = arith.constant 0.000000e+00 : f32
      %12 = vector.broadcast %cst_10 : f32 to vector<128x128xf32>
      %c0_11 = arith.constant 0 : index
      %c0_12 = arith.constant 0 : index
      %13 = vector.load %arg8[%c0_11, %c0_12] : memref<128x128xf32, #tpu.memory_space<vmem>>, vector<128x128xf32>
      tpu.vector_store %arg8[%c0_11, %c0_12], %12 {strides = array<i32>} : memref<128x128xf32, #tpu.memory_space<vmem>>, vector<128x128xf32>,
    } else {
    }
    %c0 = arith.constant 0 : index
    %c0_1 = arith.constant 0 : index
    %3 = vector.load %arg8[%c0, %c0_1] : memref<128x128xf32, #tpu.memory_space<vmem>>, vector<128x128xf32>
    %c0_2 = arith.constant 0 : index
    %c0_3 = arith.constant 0 : index
    %4 = vector.load %arg3[%c0_2, %c0_3] : memref<128x128xbf16, #tpu.memory_space<vmem>>, vector<128x128xbf16>
    %c0_4 = arith.constant 0 : index
    %c0_5 = arith.constant 0 : index
    %5 = vector.load %arg4[%c0_4, %c0_5] : memref<128x128xbf16, #tpu.memory_space<vmem>>, vector<128x128xbf16>
    %cst = arith.constant dense<0.000000e+00> : vector<128x128xf32>
    %6 = tpu.matmul %4, %5, %cst {dimension_numbers = #tpu.dot_dimension_numbers<[1], [0], [0], [1], [0, 0, 1, 1], [], []>} : vector<128x128xbf16>, vector<128x128xbf16>, vector<128x128xf32> -> vector<128x128xf32>
    %7 = arith.addf %3, %6 : vector<128x128xf32>
    %c0_6 = arith.constant 0 : index
    %c0_7 = arith.constant 0 : index
    %8 = vector.load %arg8[%c0_6, %c0_7] : memref<128x128xf32, #tpu.memory_space<vmem>>, vector<128x128xf32>
    tpu.vector_store %arg8[%c0_6, %c0_7], %7 {strides = array<i32>} : memref<128x128xf32, #tpu.memory_space<vmem>>, vector<128x128xf32>,
    %c0_i32_8 = arith.constant 0 : i32
    %9 = arith.cmpi eq, %arg2, %c0_i32_8 : i32
    %10 = arith.extui %9 : i1 to i32
    %c0_i32_9 = arith.constant 0 : i32
    %11 = arith.cmpi ne, %10, %c0_i32_9 : i32
    scf.if %11 {
      %c0_10 = arith.constant 0 : index
      %c0_11 = arith.constant 0 : index
      %12 = vector.load %arg8[%c0_10, %c0_11] : memref<128x128xf32, #tpu.memory_space<vmem>>, vector<128x128xf32>
      %c0_12 = arith.constant 0 : index
      %c0_13 = arith.constant 0 : index
      %13 = vector.load %arg5[%c0_12, %c0_13] : memref<128x128xf32, #tpu.memory_space<vmem>>, vector<128x128xf32>
      %14 = arith.addf %12, %13 : vector<128x128xf32>
      %c0_14 = arith.constant 0 : index
      %c0_15 = arith.constant 0 : index
      %15 = vector.load %arg6[%c0_14, %c0_15] : memref<1x128xf32, #tpu.memory_space<vmem>>, vector<1x128xf32>
      %16 = vector.broadcast %15 : vector<1x128xf32> to vector<128x128xf32>
      %17 = arith.addf %14, %16 : vector<128x128xf32>
      %cst_16 = arith.constant 0.000000e+00 : f32
      %18 = vector.broadcast %cst_16 : f32 to vector<128x128xf32>
      %19 = arith.maximumf %17, %18 : vector<128x128xf32>
      %20 = arith.truncf %19 : vector<128x128xf32> to vector<128x128xbf16>
      %c0_17 = arith.constant 0 : index
      %c0_18 = arith.constant 0 : index
      %21 = vector.load %arg7[%c0_17, %c0_18] : memref<128x128xbf16, #tpu.memory_space<vmem>>, vector<128x128xbf16>
      tpu.vector_store %arg7[%c0_17, %c0_18], %20 {strides = array<i32>} : memref<128x128xbf16, #tpu.memory_space<vmem>>, vector<128x128xbf16>,
    } else {
    }
    return
  }
  func.func @transform_0(%arg0: i32, %arg1: i32, %arg2: i32) -> (i32, i32) {
    %c0_i32 = arith.constant 0 : i32
    return %arg0, %arg2 : i32, i32
  }
  func.func @transform_1(%arg0: i32, %arg1: i32, %arg2: i32) -> (i32, i32) {
    %c0_i32 = arith.constant 0 : i32
    return %arg2, %arg1 : i32, i32
  }
  func.func @transform_2(%arg0: i32, %arg1: i32, %arg2: i32) -> (i32, i32) {
    %c0_i32 = arith.constant 0 : i32
    return %arg0, %arg1 : i32, i32
  }
  func.func @transform_3(%arg0: i32, %arg1: i32, %arg2: i32) -> (i32, i32) {
    %c0_i32 = arith.constant 0 : i32
    %c0_i32_0 = arith.constant 0 : i32
    return %c0_i32, %arg1 : i32, i32
  }
  func.func @transform_4(%arg0: i32, %arg1: i32, %arg2: i32) -> (i32, i32) {
    %c0_i32 = arith.constant 0 : i32
    return %arg0, %arg1 : i32, i32
  }
}

module attributes {stable_mosaic.version = 11 : i64} {
  func.func @_edge_score_kernel(%arg0: i32, %arg1: memref<128xi32, #tpu.memory_space<smem>>, %arg2: memref<128xi32, #tpu.memory_space<smem>>, %arg3: memref<128x128xf32, #tpu.memory_space<vmem>>, %arg4: memref<1x1x128xf32, #tpu.memory_space<vmem>>, %arg5: memref<128x128xf32, #tpu.memory_space<vmem>>) attributes {dimension_semantics = [#tpu.dimension_semantics<parallel>], iteration_bounds = array<i64: 1>, scalar_prefetch = 2 : i64, scratch_operands = 1 : i64, tpu.core_type = #tpu.core_type<tc>, window_params = [{pipeline_mode = #tpu.pipeline_mode<synchronous>, transform_indices = @transform_0, window_bounds = array<i64: 128, 128>}, {transform_indices = @transform_1, window_bounds = array<i64: 1, 1, 128>}]} {
    %c0_i32 = arith.constant 0 : i32
    %c128_i32 = arith.constant 128 : i32
    %0 = arith.addi %c0_i32, %c128_i32 : i32
    %c1_i32 = arith.constant 1 : i32
    scf.for %arg6 = %c0_i32 to %0 step %c1_i32  : i32 {
      %c128_i32_6 = arith.constant 128 : i32
      %7 = arith.muli %arg0, %c128_i32_6 : i32
      %8 = arith.addi %7, %arg6 : i32
      %9 = arith.index_cast %8 : i32 to index
      %10 = memref.load %arg1[%9] : memref<128xi32, #tpu.memory_space<smem>>
      %11 = arith.index_cast %8 : i32 to index
      %12 = memref.load %arg2[%11] : memref<128xi32, #tpu.memory_space<smem>>
      %13 = arith.index_cast %10 : i32 to index
      %c0_7 = arith.constant 0 : index
      %14 = vector.load %arg3[%13, %c0_7] : memref<128x128xf32, #tpu.memory_space<vmem>>, vector<1x128xf32>
      %15 = arith.index_cast %12 : i32 to index
      %c0_8 = arith.constant 0 : index
      %16 = vector.load %arg3[%15, %c0_8] : memref<128x128xf32, #tpu.memory_space<vmem>>, vector<1x128xf32>
      %17 = arith.mulf %14, %16 : vector<1x128xf32>
      %18 = arith.index_cast %arg6 : i32 to index
      %c0_9 = arith.constant 0 : index
      %19 = vector.load %arg5[%18, %c0_9] : memref<128x128xf32, #tpu.memory_space<vmem>>, vector<1x128xf32>
      tpu.vector_store %arg5[%18, %c0_9], %17 {strides = array<i32>} : memref<128x128xf32, #tpu.memory_space<vmem>>, vector<1x128xf32>,
    }
    %c128_i32_0 = arith.constant 128 : i32
    %cst = arith.constant 1.000000e+00 : f32
    %1 = vector.broadcast %cst : f32 to vector<8x128xf32>
    %c0 = arith.constant 0 : index
    %c0_1 = arith.constant 0 : index
    %2 = vector.load %arg5[%c0, %c0_1] : memref<128x128xf32, #tpu.memory_space<vmem>>, vector<128x128xf32>
    %cst_2 = arith.constant dense<0.000000e+00> : vector<8x128xf32>
    %3 = tpu.matmul %1, %2, %cst_2 {dimension_numbers = #tpu.dot_dimension_numbers<[1], [1], [0], [0], [0, 0, 1, 0], [], []>} : vector<8x128xf32>, vector<128x128xf32>, vector<8x128xf32> -> vector<8x128xf32>
    %4 = vector.extract_strided_slice %3 {offsets = [0, 0], sizes = [1, 128], strides = [1, 1]} : vector<8x128xf32> to vector<1x128xf32>
    %5 = vector.shape_cast %4 : vector<1x128xf32> to vector<1x1x128xf32>
    %c0_3 = arith.constant 0 : index
    %c0_4 = arith.constant 0 : index
    %c0_5 = arith.constant 0 : index
    %6 = vector.load %arg4[%c0_3, %c0_4, %c0_5] : memref<1x1x128xf32, #tpu.memory_space<vmem>>, vector<1x1x128xf32>
    tpu.vector_store %arg4[%c0_3, %c0_4, %c0_5], %5 {strides = array<i32>} : memref<1x1x128xf32, #tpu.memory_space<vmem>>, vector<1x1x128xf32>,
    return
  }
  func.func @transform_0(%arg0: i32, %arg1: memref<128xi32, #tpu.memory_space<smem>>, %arg2: memref<128xi32, #tpu.memory_space<smem>>) -> (i32, i32) {
    %c0_i32 = arith.constant 0 : i32
    %c0_i32_0 = arith.constant 0 : i32
    %c0_i32_1 = arith.constant 0 : i32
    return %c0_i32, %c0_i32_0 : i32, i32
  }
  func.func @transform_1(%arg0: i32, %arg1: memref<128xi32, #tpu.memory_space<smem>>, %arg2: memref<128xi32, #tpu.memory_space<smem>>) -> (i32, i32, i32) {
    %c0_i32 = arith.constant 0 : i32
    %c0_i32_0 = arith.constant 0 : i32
    %c0_i32_1 = arith.constant 0 : i32
    return %arg0, %c0_i32, %c0_i32_0 : i32, i32, i32
  }
}

module attributes {stable_mosaic.version = 11 : i64} {
  func.func @_sage_agg_kernel(%arg0: i32, %arg1: i32, %arg2: i32, %arg3: memref<128x128xbf16, #tpu.memory_space<vmem>>, %arg4: memref<128x128xbf16, #tpu.memory_space<vmem>>, %arg5: memref<128x128xf32, #tpu.memory_space<vmem>>, %arg6: memref<1x128xf32, #tpu.memory_space<vmem>>, %arg7: memref<128x128xf32, #tpu.memory_space<vmem>>, %arg8: memref<128x128xf32, #tpu.memory_space<vmem>>) attributes {dimension_semantics = [#tpu.dimension_semantics<parallel>, #tpu.dimension_semantics<parallel>, #tpu.dimension_semantics<arbitrary>], iteration_bounds = array<i64: 1, 1, 1>, scalar_prefetch = 0 : i64, scratch_operands = 1 : i64, tpu.core_type = #tpu.core_type<tc>, window_params = [{transform_indices = @transform_0, window_bounds = array<i64: 128, 128>}, {transform_indices = @transform_1, window_bounds = array<i64: 128, 128>}, {transform_indices = @transform_2, window_bounds = array<i64: 128, 128>}, {transform_indices = @transform_3, window_bounds = array<i64: 1, 128>}, {transform_indices = @transform_4, window_bounds = array<i64: 128, 128>}]} {
    %c0_i32 = arith.constant 0 : i32
    %0 = arith.cmpi eq, %arg2, %c0_i32 : i32
    %1 = arith.extui %0 : i1 to i32
    %c0_i32_0 = arith.constant 0 : i32
    %2 = arith.cmpi ne, %1, %c0_i32_0 : i32
    scf.if %2 {
      %cst_10 = arith.constant 0.000000e+00 : f32
      %12 = vector.broadcast %cst_10 : f32 to vector<128x128xf32>
      %c0_11 = arith.constant 0 : index
      %c0_12 = arith.constant 0 : index
      %13 = vector.load %arg8[%c0_11, %c0_12] : memref<128x128xf32, #tpu.memory_space<vmem>>, vector<128x128xf32>
      tpu.vector_store %arg8[%c0_11, %c0_12], %12 {strides = array<i32>} : memref<128x128xf32, #tpu.memory_space<vmem>>, vector<128x128xf32>,
    } else {
    }
    %c0 = arith.constant 0 : index
    %c0_1 = arith.constant 0 : index
    %3 = vector.load %arg8[%c0, %c0_1] : memref<128x128xf32, #tpu.memory_space<vmem>>, vector<128x128xf32>
    %c0_2 = arith.constant 0 : index
    %c0_3 = arith.constant 0 : index
    %4 = vector.load %arg3[%c0_2, %c0_3] : memref<128x128xbf16, #tpu.memory_space<vmem>>, vector<128x128xbf16>
    %c0_4 = arith.constant 0 : index
    %c0_5 = arith.constant 0 : index
    %5 = vector.load %arg4[%c0_4, %c0_5] : memref<128x128xbf16, #tpu.memory_space<vmem>>, vector<128x128xbf16>
    %cst = arith.constant dense<0.000000e+00> : vector<128x128xf32>
    %6 = tpu.matmul %4, %5, %cst {dimension_numbers = #tpu.dot_dimension_numbers<[1], [0], [0], [1], [0, 0, 1, 1], [], []>} : vector<128x128xbf16>, vector<128x128xbf16>, vector<128x128xf32> -> vector<128x128xf32>
    %7 = arith.addf %3, %6 : vector<128x128xf32>
    %c0_6 = arith.constant 0 : index
    %c0_7 = arith.constant 0 : index
    %8 = vector.load %arg8[%c0_6, %c0_7] : memref<128x128xf32, #tpu.memory_space<vmem>>, vector<128x128xf32>
    tpu.vector_store %arg8[%c0_6, %c0_7], %7 {strides = array<i32>} : memref<128x128xf32, #tpu.memory_space<vmem>>, vector<128x128xf32>,
    %c0_i32_8 = arith.constant 0 : i32
    %9 = arith.cmpi eq, %arg2, %c0_i32_8 : i32
    %10 = arith.extui %9 : i1 to i32
    %c0_i32_9 = arith.constant 0 : i32
    %11 = arith.cmpi ne, %10, %c0_i32_9 : i32
    scf.if %11 {
      %c0_10 = arith.constant 0 : index
      %c0_11 = arith.constant 0 : index
      %12 = vector.load %arg8[%c0_10, %c0_11] : memref<128x128xf32, #tpu.memory_space<vmem>>, vector<128x128xf32>
      %c0_12 = arith.constant 0 : index
      %c0_13 = arith.constant 0 : index
      %13 = vector.load %arg5[%c0_12, %c0_13] : memref<128x128xf32, #tpu.memory_space<vmem>>, vector<128x128xf32>
      %14 = arith.addf %12, %13 : vector<128x128xf32>
      %c0_14 = arith.constant 0 : index
      %c0_15 = arith.constant 0 : index
      %15 = vector.load %arg6[%c0_14, %c0_15] : memref<1x128xf32, #tpu.memory_space<vmem>>, vector<1x128xf32>
      %16 = vector.broadcast %15 : vector<1x128xf32> to vector<128x128xf32>
      %17 = arith.addf %14, %16 : vector<128x128xf32>
      %c0_16 = arith.constant 0 : index
      %c0_17 = arith.constant 0 : index
      %18 = vector.load %arg7[%c0_16, %c0_17] : memref<128x128xf32, #tpu.memory_space<vmem>>, vector<128x128xf32>
      tpu.vector_store %arg7[%c0_16, %c0_17], %17 {strides = array<i32>} : memref<128x128xf32, #tpu.memory_space<vmem>>, vector<128x128xf32>,
    } else {
    }
    return
  }
  func.func @transform_0(%arg0: i32, %arg1: i32, %arg2: i32) -> (i32, i32) {
    %c0_i32 = arith.constant 0 : i32
    return %arg0, %arg2 : i32, i32
  }
  func.func @transform_1(%arg0: i32, %arg1: i32, %arg2: i32) -> (i32, i32) {
    %c0_i32 = arith.constant 0 : i32
    return %arg2, %arg1 : i32, i32
  }
  func.func @transform_2(%arg0: i32, %arg1: i32, %arg2: i32) -> (i32, i32) {
    %c0_i32 = arith.constant 0 : i32
    return %arg0, %arg1 : i32, i32
  }
  func.func @transform_3(%arg0: i32, %arg1: i32, %arg2: i32) -> (i32, i32) {
    %c0_i32 = arith.constant 0 : i32
    %c0_i32_0 = arith.constant 0 : i32
    return %c0_i32, %arg1 : i32, i32
  }
  func.func @transform_4(%arg0: i32, %arg1: i32, %arg2: i32) -> (i32, i32) {
    %c0_i32 = arith.constant 0 : i32
    return %arg0, %arg1 : i32, i32
  }
}

</mosaic_0001>

<llo_original>
// kernel: graphsage_link_predictor.10
$region0: #{graphsage_link_predictor.10}
  #allocation0 [shape = 'u32[]', space=smem, size = 0x4, offset = 0x4, fixed_abs, tag = 'smem constant byte address 0x4 - core index']
  #allocation1 [shape = 'u32[144,128]{1,0:T(1,128)}', space=vmem, size = 0x12000, scoped, tag = 'internal scratch']
  #allocation2 [shape = 'f32[128,128]{1,0:T(8,128)}', space=vmem, size = 0x10000, scoped, tag = 'scratch operand']
  #allocation3 [shape = 's32[1]{0}', space=sflag, size = 0x4, scoped, tag = 'scoped memory for graphsage_link_predictor.10']
  #allocation4 [shape = 'u8[512]{0}', space=smem, size = 0x200, scoped, tag = 'prefetched SMEM operand 0']
  #allocation5 [shape = 'u8[512]{0}', space=smem, size = 0x200, scoped, tag = 'prefetched SMEM operand 1']
  %s0 = inlined_call_operand.vmem [shape: s32[128], index: 0, kind: input, shape index: {}]
  %s1 = inlined_call_operand.vmem [shape: s32[128], index: 1, kind: input, shape index: {}]
  %s2 = inlined_call_operand.vmem [shape: f32[128,128], index: 2, kind: input, shape index: {}]
  %s3 = inlined_call_operand.vmem [shape: f32[1,1,128], index: 3, kind: output, shape index: {}]
  %s4 = sld [smem:[#allocation0]]
  $region21: #{graphsage_link_predictor.10} parent=0
    _
  %s6 = ssub.s32 1, %s4
  %s7 = scalar_select 0, %s6, %s4
  %s8 = sshll.u32 %s0, 4
  %s9 = int_to_ptr.vmem [resolvable:$true] %s8
  %11 = dma.vmem_to_smem %s9, 16, [#allocation4], [#allocation3]
  %s12 = sshll.u32 %s1, 4
  %s13 = int_to_ptr.vmem [resolvable:$true] %s12
  %15 = dma.vmem_to_smem %s13, 16, [#allocation5], [#allocation3]
  %16 = dma.done [#allocation3], 32
  %17 = sfence
  // Predicated region
  $region2: #{graphsage_link_predictor.10} parent=0 // pred_check
    _
  $region3: #{graphsage_link_predictor.10} parent=0 // pred_check_branch
    %19 = sbr.rel (0) target = $region5
  $region4: #{graphsage_link_predictor.10} parent=0 // pred_region
    _
  $region5: #{graphsage_link_predictor.10} parent=0 // pred_fallthru
    _
  loop: start=0, step=1, limit=128
  $region6: #{graphsage_link_predictor.10} parent=0 // loop_pre_header
    _
  $region7: #{graphsage_link_predictor.10} parent=0 // loop_header
    %s21 = sphi 0, %s25
    %p22 = scmp.ge.s32.totalorder %s21, 128
  $region8: #{graphsage_link_predictor.10} parent=0 // loop_header_branch
    %24 = sbr.rel (%p22) target = $region12
  $region9: #{graphsage_link_predictor.10} parent=0 // loop_body
    %s26 = smul.u32 0, 128
    %s27 = sadd.s32 %s26, %s21
    %s28 = sld [smem:[#allocation4 + %s27]]
    %s29 = sld [smem:[#allocation5 + %s27]]
    %s30 = scalar_lea.vmem %s2, %s28
    %v31 = vld [vmem:[%s30] sm:$0x1]
    %s32 = scalar_lea.vmem %s2, %s29
    %v33 = vld [vmem:[%s32] sm:$0x1]
    %v34 = vmul.f32 %v31, %v33
    %s35 = scalar_lea.vmem [#allocation2], %s21
    %36 = vst [vmem:[%s35] sm:$0x1] %v34
  $region10: #{graphsage_link_predictor.10} parent=0 // loop_footer
    %s25 = sadd.s32 1, %s21
  $region11: #{graphsage_link_predictor.10} parent=0 // loop_footer_branch
    %20 = sbr.rel target = $region7
  $region12: #{graphsage_link_predictor.10} parent=0 // loop_exit
    _
  %v37 = vld [vmem:[#allocation2] sm:$0xff]
  %v38 = vld [vmem:[#allocation2 + $0x8] sm:$0xff]
  %v39 = vld [vmem:[#allocation2 + $0x10] sm:$0xff]
  %v40 = vld [vmem:[#allocation2 + $0x18] sm:$0xff]
  %v41 = vld [vmem:[#allocation2 + $0x20] sm:$0xff]
  %v42 = vld [vmem:[#allocation2 + $0x28] sm:$0xff]
  %v43 = vld [vmem:[#allocation2 + $0x30] sm:$0xff]
  %v44 = vld [vmem:[#allocation2 + $0x38] sm:$0xff]
  %v45 = vld [vmem:[#allocation2 + $0x40] sm:$0xff]
  %v46 = vld [vmem:[#allocation2 + $0x48] sm:$0xff]
  %v47 = vld [vmem:[#allocation2 + $0x50] sm:$0xff]
  %v48 = vld [vmem:[#allocation2 + $0x58] sm:$0xff]
  %v49 = vld [vmem:[#allocation2 + $0x60] sm:$0xff]
  %v50 = vld [vmem:[#allocation2 + $0x68] sm:$0xff]
  %v51 = vld [vmem:[#allocation2 + $0x70] sm:$0xff]
  %v52 = vld [vmem:[#allocation2 + $0x78] sm:$0xff]
  %53 = vmatprep.subr.mxu0 0.0
  %54 = vmatpush1.xpose.msra.mxu0 %v37
  %55 = vmatprep.subr.mxu0 0.0
  %56 = vmatpush1.xpose.msra.mxu0 %v38
  %57 = vmatprep.subr.mxu0 0.0
  %58 = vmatpush1.xpose.msra.mxu0 %v39
  %59 = vmatprep.subr.mxu0 0.0
  %60 = vmatpush1.xpose.msra.mxu0 %v40
  %61 = vmatprep.subr.mxu0 0.0
  %62 = vmatpush1.xpose.msra.mxu0 %v41
  %63 = vmatprep.subr.mxu0 0.0
  %64 = vmatpush1.xpose.msra.mxu0 %v42
  %65 = vmatprep.subr.mxu0 0.0
  %66 = vmatpush1.xpose.msra.mxu0 %v43
  %67 = vmatprep.subr.mxu0 0.0
  %68 = vmatpush1.xpose.msra.mxu0 %v44
  %69 = vmatprep.subr.mxu0 0.0
  %70 = vmatpush1.xpose.msra.mxu0 %v45
  %71 = vmatprep.subr.mxu0 0.0
  %72 = vmatpush1.xpose.msra.mxu0 %v46
  %73 = vmatprep.subr.mxu0 0.0
  %74 = vmatpush1.xpose.msra.mxu0 %v47
  %75 = vmatprep.subr.mxu0 0.0
  %76 = vmatpush1.xpose.msra.mxu0 %v48
  %77 = vmatprep.subr.mxu0 0.0
  %78 = vmatpush1.xpose.msra.mxu0 %v49
  %79 = vmatprep.subr.mxu0 0.0
  %80 = vmatpush1.xpose.msra.mxu0 %v50
  %81 = vmatprep.subr.mxu0 0.0
  %82 = vmatpush1.xpose.msra.mxu0 %v51
  %83 = vmatprep.subr.mxu0 0.0
  %84 = vmatpush1.xpose.msra.mxu0 %v52
  %85 = vmatprep.subr.mxu0 0.0
  %86 = vmatpush1.xpose.msra.mxu0 0.0
  %87 = vmatprep.subr.mxu0 0.0
  %88 = vmatpush1.xpose.msra.mxu0 0.0
  %89 = vmatprep.subr.mxu0 0.0
  %90 = vmatpush1.xpose.msra.mxu0 0.0
  %91 = vmatprep.subr.mxu0 0.0
  %92 = vmatpush1.xpose.msra.mxu0 0.0
  %93 = vmatprep.subr.mxu0 0.0
  %94 = vmatpush1.xpose.msra.mxu0 0.0
  %95 = vmatprep.subr.mxu0 0.0
  %96 = vmatpush1.xpose.msra.mxu0 0.0
  %97 = vmatprep.subr.mxu0 0.0
  %98 = vmatpush1.xpose.msra.mxu0 0.0
  %99 = vmatprep.subr.mxu0 0.0
  %100 = vmatpush1.xpose.msra.mxu0 0.0
  %101 = vmatprep.subr.mxu0 0.0
  %102 = vmatpush1.xpose.msra.mxu0 0.0
  %103 = vmatprep.subr.mxu0 0.0
  %104 = vmatpush1.xpose.msra.mxu0 0.0
  %105 = vmatprep.subr.mxu0 0.0
  %106 = vmatpush1.xpose.msra.mxu0 0.0
  %107 = vmatprep.subr.mxu0 0.0
  %108 = vmatpush1.xpose.msra.mxu0 0.0
  %109 = vmatprep.subr.mxu0 0.0
  %110 = vmatpush1.xpose.msra.mxu0 0.0
  %111 = vmatprep.subr.mxu0 0.0
  %112 = vmatpush1.xpose.msra.mxu0 0.0
  %113 = vmatprep.subr.mxu0 0.0
  %114 = vmatpush1.xpose.msra.mxu0 0.0
  %115 = vmatprep.subr.mxu0 0.0
  %116 = vmatpush1.xpose.msra.mxu0 0.0
  %117 = vmatprep.mubr.f32.mxu0 0.0
  %118 = vmatmul.mubr.f32.gmra.mrb[0].mxu0 1.0
  %v119 = vpop.f32.mrb[0].mxu0
  %v120 = vadd.f32 0.0, %v119
  %v121 = vpop.f32.mrb[0].mxu0
  %122 = vdwg.mxu0
  %123 = vst [vmem:[%s3] sm:$0x1] %v120
  // Predicated region
  $region13: #{graphsage_link_predictor.10} parent=0 // pred_check
    _
  $region14: #{graphsage_link_predictor.10} parent=0 // pred_check_branch
    %125 = sbr.rel (0) target = $region16
  $region15: #{graphsage_link_predictor.10} parent=0 // pred_region
    _
  $region16: #{graphsage_link_predictor.10} parent=0 // pred_fallthru
    _
  // Predicated region
  $region17: #{graphsage_link_predictor.10} parent=0 // pred_check
    _
  $region18: #{graphsage_link_predictor.10} parent=0 // pred_check_branch
    %127 = sbr.rel (0) target = $region20
  $region19: #{graphsage_link_predictor.10} parent=0 // pred_region
    _
  $region20: #{graphsage_link_predictor.10} parent=0 // pred_fallthru
    _

// kernel: graphsage_link_predictor.6
$region0: #{graphsage_link_predictor.6}
  #allocation0 [shape = 'u32[]', space=smem, size = 0x4, offset = 0x4, fixed_abs, tag = 'smem constant byte address 0x4 - core index']
  #allocation1 [shape = 'u32[144,128]{1,0:T(1,128)}', space=vmem, size = 0x12000, scoped, tag = 'internal scratch']
  #allocation2 [shape = 'f32[128,256]{1,0:T(8,128)}', space=vmem, size = 0x20000, scoped, tag = 'scratch operand']
  %s0 = inlined_call_operand.vmem [shape: bf16[128,128], index: 0, kind: input, shape index: {}]
  %s1 = inlined_call_operand.vmem [shape: bf16[128,256], index: 1, kind: input, shape index: {}]
  %s2 = inlined_call_operand.vmem [shape: f32[128,256], index: 2, kind: output, shape index: {}]
  %s3 = sld [smem:[#allocation0]]
  $region26: #{graphsage_link_predictor.6} parent=0
    _
  %s5 = ssub.s32 1, %s3
  %s6 = scalar_select 0, %s5, %s3
  // Predicated region
  $region2: #{graphsage_link_predictor.6} parent=0 // pred_check
    _
  $region3: #{graphsage_link_predictor.6} parent=0 // pred_check_branch
    %8 = sbr.rel (0) target = $region5
  $region4: #{graphsage_link_predictor.6} parent=0 // pred_region
    _
  $region5: #{graphsage_link_predictor.6} parent=0 // pred_fallthru
    _
  // Predicated region
  $region6: #{graphsage_link_predictor.6} parent=0 // pred_check
    _
  $region7: #{graphsage_link_predictor.6} parent=0 // pred_check_branch
    %10 = sbr.rel (0) target = $region9
  $region8: #{graphsage_link_predictor.6} parent=0 // pred_region
    _
  $region9: #{graphsage_link_predictor.6} parent=0 // pred_fallthru
    _
  %p12 = scmp.eq.s32.totalorder 0, 0
  // Predicated region
  $region10: #{graphsage_link_predictor.6} parent=0 // pred_check
    %p13 = pneg %p12
  $region11: #{graphsage_link_predictor.6} parent=0 // pred_check_branch
    %15 = sbr.rel (%p13) target = $region13
  $region12: #{graphsage_link_predictor.6} parent=0 // pred_region
    %16 = vst [vmem:[#allocation2] sm:$0xff] 0.0
    %17 = vst [vmem:[#allocation2 + $0x8] sm:$0xff] 0.0
    %18 = vst [vmem:[#allocation2 + $0x10] sm:$0xff] 0.0
    %19 = vst [vmem:[#allocation2 + $0x18] sm:$0xff] 0.0
    %20 = vst [vmem:[#allocation2 + $0x20] sm:$0xff] 0.0
    %21 = vst [vmem:[#allocation2 + $0x28] sm:$0xff] 0.0
    %22 = vst [vmem:[#allocation2 + $0x30] sm:$0xff] 0.0
    %23 = vst [vmem:[#allocation2 + $0x38] sm:$0xff] 0.0
    %24 = vst [vmem:[#allocation2 + $0x40] sm:$0xff] 0.0
    %25 = vst [vmem:[#allocation2 + $0x48] sm:$0xff] 0.0
    %26 = vst [vmem:[#allocation2 + $0x50] sm:$0xff] 0.0
    %27 = vst [vmem:[#allocation2 + $0x58] sm:$0xff] 0.0
    %28 = vst [vmem:[#allocation2 + $0x60] sm:$0xff] 0.0
    %29 = vst [vmem:[#allocation2 + $0x68] sm:$0xff] 0.0
    %30 = vst [vmem:[#allocation2 + $0x70] sm:$0xff] 0.0
    %31 = vst [vmem:[#allocation2 + $0x78] sm:$0xff] 0.0
    %32 = vst [vmem:[#allocation2 + $0x80] sm:$0xff] 0.0
    %33 = vst [vmem:[#allocation2 + $0x88] sm:$0xff] 0.0
    %34 = vst [vmem:[#allocation2 + $0x90] sm:$0xff] 0.0
    %35 = vst [vmem:[#allocation2 + $0x98] sm:$0xff] 0.0
    %36 = vst [vmem:[#allocation2 + $0xa0] sm:$0xff] 0.0
    %37 = vst [vmem:[#allocation2 + $0xa8] sm:$0xff] 0.0
    %38 = vst [vmem:[#allocation2 + $0xb0] sm:$0xff] 0.0
    %39 = vst [vmem:[#allocation2 + $0xb8] sm:$0xff] 0.0
    %40 = vst [vmem:[#allocation2 + $0xc0] sm:$0xff] 0.0
    %41 = vst [vmem:[#allocation2 + $0xc8] sm:$0xff] 0.0
    %42 = vst [vmem:[#allocation2 + $0xd0] sm:$0xff] 0.0
    %43 = vst [vmem:[#allocation2 + $0xd8] sm:$0xff] 0.0
    %44 = vst [vmem:[#allocation2 + $0xe0] sm:$0xff] 0.0
    %45 = vst [vmem:[#allocation2 + $0xe8] sm:$0xff] 0.0
    %46 = vst [vmem:[#allocation2 + $0xf0] sm:$0xff] 0.0
    %47 = vst [vmem:[#allocation2 + $0xf8] sm:$0xff] 0.0
  $region13: #{graphsage_link_predictor.6} parent=0 // pred_fallthru
    _
  %v48 = vld [vmem:[#allocation2] sm:$0xff]
  %v49 = vld [vmem:[#allocation2 + $0x8] sm:$0xff]
  %v50 = vld [vmem:[#allocation2 + $0x10] sm:$0xff]
  %v51 = vld [vmem:[#allocation2 + $0x18] sm:$0xff]
  %v52 = vld [vmem:[#allocation2 + $0x20] sm:$0xff]
  %v53 = vld [vmem:[#allocation2 + $0x28] sm:$0xff]
  %v54 = vld [vmem:[#allocation2 + $0x30] sm:$0xff]
  %v55 = vld [vmem:[#allocation2 + $0x38] sm:$0xff]
  %v56 = vld [vmem:[#allocation2 + $0x40] sm:$0xff]
  %v57 = vld [vmem:[#allocation2 + $0x48] sm:$0xff]
  %v58 = vld [vmem:[#allocation2 + $0x50] sm:$0xff]
  %v59 = vld [vmem:[#allocation2 + $0x58] sm:$0xff]
  %v60 = vld [vmem:[#allocation2 + $0x60] sm:$0xff]
  %v61 = vld [vmem:[#allocation2 + $0x68] sm:$0xff]
  %v62 = vld [vmem:[#allocation2 + $0x70] sm:$0xff]
  %v63 = vld [vmem:[#allocation2 + $0x78] sm:$0xff]
  %v64 = vld [vmem:[#allocation2 + $0x80] sm:$0xff]
  %v65 = vld [vmem:[#allocation2 + $0x88] sm:$0xff]
  %v66 = vld [vmem:[#allocation2 + $0x90] sm:$0xff]
  %v67 = vld [vmem:[#allocation2 + $0x98] sm:$0xff]
  %v68 = vld [vmem:[#allocation2 + $0xa0] sm:$0xff]
  %v69 = vld [vmem:[#allocation2 + $0xa8] sm:$0xff]
  %v70 = vld [vmem:[#allocation2 + $0xb0] sm:$0xff]
  %v71 = vld [vmem:[#allocation2 + $0xb8] sm:$0xff]
  %v72 = vld [vmem:[#allocation2 + $0xc0] sm:$0xff]
  %v73 = vld [vmem:[#allocation2 + $0xc8] sm:$0xff]
  %v74 = vld [vmem:[#allocation2 + $0xd0] sm:$0xff]
  %v75 = vld [vmem:[#allocation2 + $0xd8] sm:$0xff]
  %v76 = vld [vmem:[#allocation2 + $0xe0] sm:$0xff]
  %v77 = vld [vmem:[#allocation2 + $0xe8] sm:$0xff]
  %v78 = vld [vmem:[#allocation2 + $0xf0] sm:$0xff]
  %v79 = vld [vmem:[#allocation2 + $0xf8] sm:$0xff]
  %v80 = vld [vmem:[%s0] sm:$0xf]
  %v81 = vld [vmem:[%s0 + $0x4] sm:$0xf]
  %v82 = vld [vmem:[%s0 + $0x8] sm:$0xf]
  %v83 = vld [vmem:[%s0 + $0xc] sm:$0xf]
  %v84 = vld [vmem:[%s0 + $0x10] sm:$0xf]
  %v85 = vld [vmem:[%s0 + $0x14] sm:$0xf]
  %v86 = vld [vmem:[%s0 + $0x18] sm:$0xf]
  %v87 = vld [vmem:[%s0 + $0x1c] sm:$0xf]
  %v88 = vld [vmem:[%s0 + $0x20] sm:$0xf]
  %v89 = vld [vmem:[%s0 + $0x24] sm:$0xf]
  %v90 = vld [vmem:[%s0 + $0x28] sm:$0xf]
  %v91 = vld [vmem:[%s0 + $0x2c] sm:$0xf]
  %v92 = vld [vmem:[%s0 + $0x30] sm:$0xf]
  %v93 = vld [vmem:[%s0 + $0x34] sm:$0xf]
  %v94 = vld [vmem:[%s0 + $0x38] sm:$0xf]
  %v95 = vld [vmem:[%s0 + $0x3c] sm:$0xf]
  %v96 = vld [vmem:[%s1] sm:$0xff]
  %v97 = vld [vmem:[%s1 + $0x8] sm:$0xff]
  %v98 = vld [vmem:[%s1 + $0x10] sm:$0xff]
  %v99 = vld [vmem:[%s1 + $0x18] sm:$0xff]
  %v100 = vld [vmem:[%s1 + $0x20] sm:$0xff]
  %v101 = vld [vmem:[%s1 + $0x28] sm:$0xff]
  %v102 = vld [vmem:[%s1 + $0x30] sm:$0xff]
  %v103 = vld [vmem:[%s1 + $0x38] sm:$0xff]
  %v104 = vld [vmem:[%s1 + $0x40] sm:$0xff]
  %v105 = vld [vmem:[%s1 + $0x48] sm:$0xff]
  %v106 = vld [vmem:[%s1 + $0x50] sm:$0xff]
  %v107 = vld [vmem:[%s1 + $0x58] sm:$0xff]
  %v108 = vld [vmem:[%s1 + $0x60] sm:$0xff]
  %v109 = vld [vmem:[%s1 + $0x68] sm:$0xff]
  %v110 = vld [vmem:[%s1 + $0x70] sm:$0xff]
  %v111 = vld [vmem:[%s1 + $0x78] sm:$0xff]
  %v128 = vunpack.c.l.b16 %v80
  %v129 = vunpack.c.l.b16 %v81
  %v130 = vunpack.c.l.b16 %v82
  %v131 = vunpack.c.l.b16 %v83
  %v132 = vunpack.c.l.b16 %v84
  %v133 = vunpack.c.l.b16 %v85
  %v134 = vunpack.c.l.b16 %v86
  %v135 = vunpack.c.l.b16 %v87
  %v136 = vunpack.c.l.b16 %v88
  %v137 = vunpack.c.l.b16 %v89
  %v138 = vunpack.c.l.b16 %v90
  %v139 = vunpack.c.l.b16 %v91
  %v140 = vunpack.c.l.b16 %v92
  %v141 = vunpack.c.l.b16 %v93
  %v142 = vunpack.c.l.b16 %v94
  %v143 = vunpack.c.l.b16 %v95
  %v144 = vpack.c.b16 %v129, %v128
  %v145 = vpack.c.b16 %v131, %v130
  %v146 = vpack.c.b16 %v133, %v132
  %v147 = vpack.c.b16 %v135, %v134
  %v148 = vpack.c.b16 %v137, %v136
  %v149 = vpack.c.b16 %v139, %v138
  %v150 = vpack.c.b16 %v141, %v140
  %v151 = vpack.c.b16 %v143, %v142
  %v176 = vunpack.c.l.b16 %v96
  %v177 = vunpack.c.h.b16 %v96
  %v178 = vunpack.c.l.b16 %v97
  %v179 = vunpack.c.h.b16 %v97
  %v180 = vunpack.c.l.b16 %v98
  %v181 = vunpack.c.h.b16 %v98
  %v182 = vunpack.c.l.b16 %v99
  %v183 = vunpack.c.h.b16 %v99
  %v184 = vunpack.c.l.b16 %v100
  %v185 = vunpack.c.h.b16 %v100
  %v186 = vunpack.c.l.b16 %v101
  %v187 = vunpack.c.h.b16 %v101
  %v188 = vunpack.c.l.b16 %v102
  %v189 = vunpack.c.h.b16 %v102
  %v190 = vunpack.c.l.b16 %v103
  %v191 = vunpack.c.h.b16 %v103
  %v192 = vunpack.c.l.b16 %v104
  %v193 = vunpack.c.h.b16 %v104
  %v194 = vunpack.c.l.b16 %v105
  %v195 = vunpack.c.h.b16 %v105
  %v196 = vunpack.c.l.b16 %v106
  %v197 = vunpack.c.h.b16 %v106
  %v198 = vunpack.c.l.b16 %v107
  %v199 = vunpack.c.h.b16 %v107
  %v200 = vunpack.c.l.b16 %v108
  %v201 = vunpack.c.h.b16 %v108
  %v202 = vunpack.c.l.b16 %v109
  %v203 = vunpack.c.h.b16 %v109
  %v204 = vunpack.c.l.b16 %v110
  %v205 = vunpack.c.h.b16 %v110
  %v206 = vunpack.c.l.b16 %v111
  %v207 = vunpack.c.h.b16 %v111
  %v208 = vpack.c.b16 %v178, %v176
  %v209 = vpack.c.b16 %v179, %v177
  %v210 = vpack.c.b16 %v182, %v180
  %v211 = vpack.c.b16 %v183, %v181
  %v212 = vpack.c.b16 %v186, %v184
  %v213 = vpack.c.b16 %v187, %v185
  %v214 = vpack.c.b16 %v190, %v188
  %v215 = vpack.c.b16 %v191, %v189
  %v216 = vpack.c.b16 %v194, %v192
  %v217 = vpack.c.b16 %v195, %v193
  %v218 = vpack.c.b16 %v198, %v196
  %v219 = vpack.c.b16 %v199, %v197
  %v220 = vpack.c.b16 %v202, %v200
  %v221 = vpack.c.b16 %v203, %v201
  %v222 = vpack.c.b16 %v206, %v204
  %v223 = vpack.c.b16 %v207, %v205
  %240 = vmatprep.subr.bf16.mxu0 %v209
  %241 = vmatpush1.bf16.msra.mxu0 %v208
  %242 = vmatprep.subr.bf16.mxu0 %v211
  %243 = vmatpush1.bf16.msra.mxu0 %v210
  %244 = vmatprep.subr.bf16.mxu0 %v213
  %245 = vmatpush1.bf16.msra.mxu0 %v212
  %246 = vmatprep.subr.bf16.mxu0 %v215
  %247 = vmatpush1.bf16.msra.mxu0 %v214
  %248 = vmatprep.subr.bf16.mxu0 %v217
  %249 = vmatpush1.bf16.msra.mxu0 %v216
  %250 = vmatprep.subr.bf16.mxu0 %v219
  %251 = vmatpush1.bf16.msra.mxu0 %v218
  %252 = vmatprep.subr.bf16.mxu0 %v221
  %253 = vmatpush1.bf16.msra.mxu0 %v220
  %254 = vmatprep.subr.bf16.mxu0 %v223
  %255 = vmatpush1.bf16.msra.mxu0 %v222
  %256 = vmatprep.subr.bf16.mxu0 0
  %257 = vmatpush1.bf16.msra.mxu0 0
  %258 = vmatprep.subr.bf16.mxu0 0
  %259 = vmatpush1.bf16.msra.mxu0 0
  %260 = vmatprep.subr.bf16.mxu0 0
  %261 = vmatpush1.bf16.msra.mxu0 0
  %262 = vmatprep.subr.bf16.mxu0 0
  %263 = vmatpush1.bf16.msra.mxu0 0
  %264 = vmatprep.subr.bf16.mxu0 0
  %265 = vmatpush1.bf16.msra.mxu0 0
  %266 = vmatprep.subr.bf16.mxu0 0
  %267 = vmatpush1.bf16.msra.mxu0 0
  %268 = vmatprep.subr.bf16.mxu0 0
  %269 = vmatpush1.bf16.msra.mxu0 0
  %270 = vmatprep.subr.bf16.mxu0 0
  %271 = vmatpush1.bf16.msra.mxu0 0
  %272 = vmatprep.mubr.bf16.mxu0 0
  %273 = vmatmul.mubr.bf16.gmra.mrb[0].mxu0 %v144
  %v274 = vpop.f32.mrb[0].mxu0
  %v275 = vadd.f32 0.0, %v274
  %v276 = vpop.f32.mrb[0].mxu0
  %v277 = vadd.f32 0.0, %v276
  %v278 = vpop.f32.mrb[0].mxu0
  %v279 = vadd.f32 0.0, %v278
  %v280 = vpop.f32.mrb[0].mxu0
  %v281 = vadd.f32 0.0, %v280
  %282 = vmatprep.mubr.bf16.mxu0 0
  %283 = vmatmul.mubr.bf16.gmra.mrb[0].mxu0 %v145
  %v284 = vpop.f32.mrb[0].mxu0
  %v285 = vadd.f32 0.0, %v284
  %v286 = vpop.f32.mrb[0].mxu0
  %v287 = vadd.f32 0.0, %v286
  %v288 = vpop.f32.mrb[0].mxu0
  %v289 = vadd.f32 0.0, %v288
  %v290 = vpop.f32.mrb[0].mxu0
  %v291 = vadd.f32 0.0, %v290
  %292 = vmatprep.mubr.bf16.mxu0 0
  %293 = vmatmul.mubr.bf16.gmra.mrb[0].mxu0 %v146
  %v294 = vpop.f32.mrb[0].mxu0
  %v295 = vadd.f32 0.0, %v294
  %v296 = vpop.f32.mrb[0].mxu0
  %v297 = vadd.f32 0.0, %v296
  %v298 = vpop.f32.mrb[0].mxu0
  %v299 = vadd.f32 0.0, %v298
  %v300 = vpop.f32.mrb[0].mxu0
  %v301 = vadd.f32 0.0, %v300
  %302 = vmatprep.mubr.bf16.mxu0 0
  %303 = vmatmul.mubr.bf16.gmra.mrb[0].mxu0 %v147
  %v304 = vpop.f32.mrb[0].mxu0
  %v305 = vadd.f32 0.0, %v304
  %v306 = vpop.f32.mrb[0].mxu0
  %v307 = vadd.f32 0.0, %v306
  %v308 = vpop.f32.mrb[0].mxu0
  %v309 = vadd.f32 0.0, %v308
  %v310 = vpop.f32.mrb[0].mxu0
  %v311 = vadd.f32 0.0, %v310
  %312 = vmatprep.mubr.bf16.mxu0 0
  %313 = vmatmul.mubr.bf16.gmra.mrb[0].mxu0 %v148
  %v314 = vpop.f32.mrb[0].mxu0
  %v315 = vadd.f32 0.0, %v314
  %v316 = vpop.f32.mrb[0].mxu0
  %v317 = vadd.f32 0.0, %v316
  %v318 = vpop.f32.mrb[0].mxu0
  %v319 = vadd.f32 0.0, %v318
  %v320 = vpop.f32.mrb[0].mxu0
  %v321 = vadd.f32 0.0, %v320
  %322 = vmatprep.mubr.bf16.mxu0 0
  %323 = vmatmul.mubr.bf16.gmra.mrb[0].mxu0 %v149
  %v324 = vpop.f32.mrb[0].mxu0
  %v325 = vadd.f32 0.0, %v324
  %v326 = vpop.f32.mrb[0].mxu0
  %v327 = vadd.f32 0.0, %v326
  %v328 = vpop.f32.mrb[0].mxu0
  %v329 = vadd.f32 0.0, %v328
  %v330 = vpop.f32.mrb[0].mxu0
  %v331 = vadd.f32 0.0, %v330
  %332 = vmatprep.mubr.bf16.mxu0 0
  %333 = vmatmul.mubr.bf16.gmra.mrb[0].mxu0 %v150
  %v334 = vpop.f32.mrb[0].mxu0
  %v335 = vadd.f32 0.0, %v334
  %v336 = vpop.f32.mrb[0].mxu0
  %v337 = vadd.f32 0.0, %v336
  %v338 = vpop.f32.mrb[0].mxu0
  %v339 = vadd.f32 0.0, %v338
  %v340 = vpop.f32.mrb[0].mxu0
  %v341 = vadd.f32 0.0, %v340
  %342 = vmatprep.mubr.bf16.mxu0 0
  %343 = vmatmul.mubr.bf16.gmra.mrb[0].mxu0 %v151
  %v344 = vpop.f32.mrb[0].mxu0
  %v345 = vadd.f32 0.0, %v344
  %v346 = vpop.f32.mrb[0].mxu0
  %v347 = vadd.f32 0.0, %v346
  %v348 = vpop.f32.mrb[0].mxu0
  %v349 = vadd.f32 0.0, %v348
  %v350 = vpop.f32.mrb[0].mxu0
  %v351 = vadd.f32 0.0, %v350
  %352 = vdwg.mxu0
  %v353 = vadd.f32 %v48, %v275
  %v354 = vadd.f32 %v49, %v277
  %v355 = vadd.f32 %v50, %v279
  %v356 = vadd.f32 %v51, %v281
  %v357 = vadd.f32 %v52, %v285
  %v358 = vadd.f32 %v53, %v287
  %v359 = vadd.f32 %v54, %v289
  %v360 = vadd.f32 %v55, %v291
  %v361 = vadd.f32 %v56, %v295
  %v362 = vadd.f32 %v57, %v297
  %v363 = vadd.f32 %v58, %v299
  %v364 = vadd.f32 %v59, %v301
  %v365 = vadd.f32 %v60, %v305
  %v366 = vadd.f32 %v61, %v307
  %v367 = vadd.f32 %v62, %v309
  %v368 = vadd.f32 %v63, %v311
  %v369 = vadd.f32 %v64, %v315
  %v370 = vadd.f32 %v65, %v317
  %v371 = vadd.f32 %v66, %v319
  %v372 = vadd.f32 %v67, %v321
  %v373 = vadd.f32 %v68, %v325
  %v374 = vadd.f32 %v69, %v327
  %v375 = vadd.f32 %v70, %v329
  %v376 = vadd.f32 %v71, %v331
  %v377 = vadd.f32 %v72, %v335
  %v378 = vadd.f32 %v73, %v337
  %v379 = vadd.f32 %v74, %v339
  %v380 = vadd.f32 %v75, %v341
  %v381 = vadd.f32 %v76, %v345
  %v382 = vadd.f32 %v77, %v347
  %v383 = vadd.f32 %v78, %v349
  %v384 = vadd.f32 %v79, %v351
  %385 = vst [vmem:[#allocation2] sm:$0xff] %v353
  %386 = vst [vmem:[#allocation2 + $0x8] sm:$0xff] %v354
  %387 = vst [vmem:[#allocation2 + $0x10] sm:$0xff] %v355
  %388 = vst [vmem:[#allocation2 + $0x18] sm:$0xff] %v356
  %389 = vst [vmem:[#allocation2 + $0x20] sm:$0xff] %v357
  %390 = vst [vmem:[#allocation2 + $0x28] sm:$0xff] %v358
  %391 = vst [vmem:[#allocation2 + $0x30] sm:$0xff] %v359
  %392 = vst [vmem:[#allocation2 + $0x38] sm:$0xff] %v360
  %393 = vst [vmem:[#allocation2 + $0x40] sm:$0xff] %v361
  %394 = vst [vmem:[#allocation2 + $0x48] sm:$0xff] %v362
  %395 = vst [vmem:[#allocation2 + $0x50] sm:$0xff] %v363
  %396 = vst [vmem:[#allocation2 + $0x58] sm:$0xff] %v364
  %397 = vst [vmem:[#allocation2 + $0x60] sm:$0xff] %v365
  %398 = vst [vmem:[#allocation2 + $0x68] sm:$0xff] %v366
  %399 = vst [vmem:[#allocation2 + $0x70] sm:$0xff] %v367
  %400 = vst [vmem:[#allocation2 + $0x78] sm:$0xff] %v368
  %401 = vst [vmem:[#allocation2 + $0x80] sm:$0xff] %v369
  %402 = vst [vmem:[#allocation2 + $0x88] sm:$0xff] %v370
  %403 = vst [vmem:[#allocation2 + $0x90] sm:$0xff] %v371
  %404 = vst [vmem:[#allocation2 + $0x98] sm:$0xff] %v372
  %405 = vst [vmem:[#allocation2 + $0xa0] sm:$0xff] %v373
  %406 = vst [vmem:[#allocation2 + $0xa8] sm:$0xff] %v374
  %407 = vst [vmem:[#allocation2 + $0xb0] sm:$0xff] %v375
  %408 = vst [vmem:[#allocation2 + $0xb8] sm:$0xff] %v376
  %409 = vst [vmem:[#allocation2 + $0xc0] sm:$0xff] %v377
  %410 = vst [vmem:[#allocation2 + $0xc8] sm:$0xff] %v378
  %411 = vst [vmem:[#allocation2 + $0xd0] sm:$0xff] %v379
  %412 = vst [vmem:[#allocation2 + $0xd8] sm:$0xff] %v380
  %413 = vst [vmem:[#allocation2 + $0xe0] sm:$0xff] %v381
  %414 = vst [vmem:[#allocation2 + $0xe8] sm:$0xff] %v382
  %415 = vst [vmem:[#allocation2 + $0xf0] sm:$0xff] %v383
  %416 = vst [vmem:[#allocation2 + $0xf8] sm:$0xff] %v384
  // Predicated region
  $region14: #{graphsage_link_predictor.6} parent=0 // pred_check
    %p417 = pneg %p12
  $region15: #{graphsage_link_predictor.6} parent=0 // pred_check_branch
    %419 = sbr.rel (%p417) target = $region17
  $region16: #{graphsage_link_predictor.6} parent=0 // pred_region
    %v420 = vld [vmem:[#allocation2] sm:$0xff]
    %v421 = vld [vmem:[#allocation2 + $0x8] sm:$0xff]
    %v422 = vld [vmem:[#allocation2 + $0x10] sm:$0xff]
    %v423 = vld [vmem:[#allocation2 + $0x18] sm:$0xff]
    %v424 = vld [vmem:[#allocation2 + $0x20] sm:$0xff]
    %v425 = vld [vmem:[#allocation2 + $0x28] sm:$0xff]
    %v426 = vld [vmem:[#allocation2 + $0x30] sm:$0xff]
    %v427 = vld [vmem:[#allocation2 + $0x38] sm:$0xff]
    %v428 = vld [vmem:[#allocation2 + $0x40] sm:$0xff]
    %v429 = vld [vmem:[#allocation2 + $0x48] sm:$0xff]
    %v430 = vld [vmem:[#allocation2 + $0x50] sm:$0xff]
    %v431 = vld [vmem:[#allocation2 + $0x58] sm:$0xff]
    %v432 = vld [vmem:[#allocation2 + $0x60] sm:$0xff]
    %v433 = vld [vmem:[#allocation2 + $0x68] sm:$0xff]
    %v434 = vld [vmem:[#allocation2 + $0x70] sm:$0xff]
    %v435 = vld [vmem:[#allocation2 + $0x78] sm:$0xff]
    %v436 = vld [vmem:[#allocation2 + $0x80] sm:$0xff]
    %v437 = vld [vmem:[#allocation2 + $0x88] sm:$0xff]
    %v438 = vld [vmem:[#allocation2 + $0x90] sm:$0xff]
    %v439 = vld [vmem:[#allocation2 + $0x98] sm:$0xff]
    %v440 = vld [vmem:[#allocation2 + $0xa0] sm:$0xff]
    %v441 = vld [vmem:[#allocation2 + $0xa8] sm:$0xff]
    %v442 = vld [vmem:[#allocation2 + $0xb0] sm:$0xff]
    %v443 = vld [vmem:[#allocation2 + $0xb8] sm:$0xff]
    %v444 = vld [vmem:[#allocation2 + $0xc0] sm:$0xff]
    %v445 = vld [vmem:[#allocation2 + $0xc8] sm:$0xff]
    %v446 = vld [vmem:[#allocation2 + $0xd0] sm:$0xff]
    %v447 = vld [vmem:[#allocation2 + $0xd8] sm:$0xff]
    %v448 = vld [vmem:[#allocation2 + $0xe0] sm:$0xff]
    %v449 = vld [vmem:[#allocation2 + $0xe8] sm:$0xff]
    %v450 = vld [vmem:[#allocation2 + $0xf0] sm:$0xff]
    %v451 = vld [vmem:[#allocation2 + $0xf8] sm:$0xff]
    %452 = vst [vmem:[%s2] sm:$0xff] %v420
    %453 = vst [vmem:[%s2 + $0x8] sm:$0xff] %v421
    %454 = vst [vmem:[%s2 + $0x10] sm:$0xff] %v422
    %455 = vst [vmem:[%s2 + $0x18] sm:$0xff] %v423
    %456 = vst [vmem:[%s2 + $0x20] sm:$0xff] %v424
    %457 = vst [vmem:[%s2 + $0x28] sm:$0xff] %v425
    %458 = vst [vmem:[%s2 + $0x30] sm:$0xff] %v426
    %459 = vst [vmem:[%s2 + $0x38] sm:$0xff] %v427
    %460 = vst [vmem:[%s2 + $0x40] sm:$0xff] %v428
    %461 = vst [vmem:[%s2 + $0x48] sm:$0xff] %v429
    %462 = vst [vmem:[%s2 + $0x50] sm:$0xff] %v430
    %463 = vst [vmem:[%s2 + $0x58] sm:$0xff] %v431
    %464 = vst [vmem:[%s2 + $0x60] sm:$0xff] %v432
    %465 = vst [vmem:[%s2 + $0x68] sm:$0xff] %v433
    %466 = vst [vmem:[%s2 + $0x70] sm:$0xff] %v434
    %467 = vst [vmem:[%s2 + $0x78] sm:$0xff] %v435
    %468 = vst [vmem:[%s2 + $0x80] sm:$0xff] %v436
    %469 = vst [vmem:[%s2 + $0x88] sm:$0xff] %v437
    %470 = vst [vmem:[%s2 + $0x90] sm:$0xff] %v438
    %471 = vst [vmem:[%s2 + $0x98] sm:$0xff] %v439
    %472 = vst [vmem:[%s2 + $0xa0] sm:$0xff] %v440
    %473 = vst [vmem:[%s2 + $0xa8] sm:$0xff] %v441
    %474 = vst [vmem:[%s2 + $0xb0] sm:$0xff] %v442
    %475 = vst [vmem:[%s2 + $0xb8] sm:$0xff] %v443
    %476 = vst [vmem:[%s2 + $0xc0] sm:$0xff] %v444
    %477 = vst [vmem:[%s2 + $0xc8] sm:$0xff] %v445
    %478 = vst [vmem:[%s2 + $0xd0] sm:$0xff] %v446
    %479 = vst [vmem:[%s2 + $0xd8] sm:$0xff] %v447
    %480 = vst [vmem:[%s2 + $0xe0] sm:$0xff] %v448
    %481 = vst [vmem:[%s2 + $0xe8] sm:$0xff] %v449
    %482 = vst [vmem:[%s2 + $0xf0] sm:$0xff] %v450
    %483 = vst [vmem:[%s2 + $0xf8] sm:$0xff] %v451
  $region17: #{graphsage_link_predictor.6} parent=0 // pred_fallthru
    _
  // Predicated region
  $region18: #{graphsage_link_predictor.6} parent=0 // pred_check
    _
  $region19: #{graphsage_link_predictor.6} parent=0 // pred_check_branch
    %485 = sbr.rel (0) target = $region21
  $region20: #{graphsage_link_predictor.6} parent=0 // pred_region
    _
  $region21: #{graphsage_link_predictor.6} parent=0 // pred_fallthru
    _
  // Predicated region
  $region22: #{graphsage_link_predictor.6} parent=0 // pred_check
    _
  $region23: #{graphsage_link_predictor.6} parent=0 // pred_check_branch
    %487 = sbr.rel (0) target = $region25
  $region24: #{graphsage_link_predictor.6} parent=0 // pred_region
    _
  $region25: #{graphsage_link_predictor.6} parent=0 // pred_fallthru
    _

// kernel: graphsage_link_predictor.7
$region0: #{graphsage_link_predictor.7}
  #allocation0 [shape = 'u32[]', space=smem, size = 0x4, offset = 0x4, fixed_abs, tag = 'smem constant byte address 0x4 - core index']
  #allocation1 [shape = 'u32[144,128]{1,0:T(1,128)}', space=vmem, size = 0x12000, scoped, tag = 'internal scratch']
  #allocation2 [shape = 'f32[128,128]{1,0:T(8,128)}', space=vmem, size = 0x10000, scoped, tag = 'scratch operand']
  %s0 = inlined_call_operand.vmem [shape: bf16[128,128], index: 0, kind: input, shape index: {}]
  %s1 = inlined_call_operand.vmem [shape: bf16[128,128], index: 1, kind: input, shape index: {}]
  %s2 = inlined_call_operand.vmem [shape: f32[128,128], index: 2, kind: input, shape index: {}]
  %s3 = inlined_call_operand.vmem [shape: f32[1,128], index: 3, kind: input, shape index: {}]
  %s4 = inlined_call_operand.vmem [shape: bf16[128,128], index: 4, kind: output, shape index: {}]
  %s5 = sld [smem:[#allocation0]]
  $region34: #{graphsage_link_predictor.7} parent=0
    _
  %s7 = ssub.s32 1, %s5
  %s8 = scalar_select 0, %s7, %s5
  // Predicated region
  $region2: #{graphsage_link_predictor.7} parent=0 // pred_check
    _
  $region3: #{graphsage_link_predictor.7} parent=0 // pred_check_branch
    %10 = sbr.rel (0) target = $region5
  $region4: #{graphsage_link_predictor.7} parent=0 // pred_region
    _
  $region5: #{graphsage_link_predictor.7} parent=0 // pred_fallthru
    _
  // Predicated region
  $region6: #{graphsage_link_predictor.7} parent=0 // pred_check
    _
  $region7: #{graphsage_link_predictor.7} parent=0 // pred_check_branch
    %12 = sbr.rel (0) target = $region9
  $region8: #{graphsage_link_predictor.7} parent=0 // pred_region
    _
  $region9: #{graphsage_link_predictor.7} parent=0 // pred_fallthru
    _
  // Predicated region
  $region10: #{graphsage_link_predictor.7} parent=0 // pred_check
    _
  $region11: #{graphsage_link_predictor.7} parent=0 // pred_check_branch
    %14 = sbr.rel (0) target = $region13
  $region12: #{graphsage_link_predictor.7} parent=0 // pred_region
    _
  $region13: #{graphsage_link_predictor.7} parent=0 // pred_fallthru
    _
  // Predicated region
  $region14: #{graphsage_link_predictor.7} parent=0 // pred_check
    _
  $region15: #{graphsage_link_predictor.7} parent=0 // pred_check_branch
    %16 = sbr.rel (0) target = $region17
  $region16: #{graphsage_link_predictor.7} parent=0 // pred_region
    _
  $region17: #{graphsage_link_predictor.7} parent=0 // pred_fallthru
    _
  %p18 = scmp.eq.s32.totalorder 0, 0
  // Predicated region
  $region18: #{graphsage_link_predictor.7} parent=0 // pred_check
    %p19 = pneg %p18
  $region19: #{graphsage_link_predictor.7} parent=0 // pred_check_branch
    %21 = sbr.rel (%p19) target = $region21
  $region20: #{graphsage_link_predictor.7} parent=0 // pred_region
    %22 = vst [vmem:[#allocation2] sm:$0xff] 0.0
    %23 = vst [vmem:[#allocation2 + $0x8] sm:$0xff] 0.0
    %24 = vst [vmem:[#allocation2 + $0x10] sm:$0xff] 0.0
    %25 = vst [vmem:[#allocation2 + $0x18] sm:$0xff] 0.0
    %26 = vst [vmem:[#allocation2 + $0x20] sm:$0xff] 0.0
    %27 = vst [vmem:[#allocation2 + $0x28] sm:$0xff] 0.0
    %28 = vst [vmem:[#allocation2 + $0x30] sm:$0xff] 0.0
    %29 = vst [vmem:[#allocation2 + $0x38] sm:$0xff] 0.0
    %30 = vst [vmem:[#allocation2 + $0x40] sm:$0xff] 0.0
    %31 = vst [vmem:[#allocation2 + $0x48] sm:$0xff] 0.0
    %32 = vst [vmem:[#allocation2 + $0x50] sm:$0xff] 0.0
    %33 = vst [vmem:[#allocation2 + $0x58] sm:$0xff] 0.0
    %34 = vst [vmem:[#allocation2 + $0x60] sm:$0xff] 0.0
    %35 = vst [vmem:[#allocation2 + $0x68] sm:$0xff] 0.0
    %36 = vst [vmem:[#allocation2 + $0x70] sm:$0xff] 0.0
    %37 = vst [vmem:[#allocation2 + $0x78] sm:$0xff] 0.0
  $region21: #{graphsage_link_predictor.7} parent=0 // pred_fallthru
    _
  %v38 = vld [vmem:[#allocation2] sm:$0xff]
  %v39 = vld [vmem:[#allocation2 + $0x8] sm:$0xff]
  %v40 = vld [vmem:[#allocation2 + $0x10] sm:$0xff]
  %v41 = vld [vmem:[#allocation2 + $0x18] sm:$0xff]
  %v42 = vld [vmem:[#allocation2 + $0x20] sm:$0xff]
  %v43 = vld [vmem:[#allocation2 + $0x28] sm:$0xff]
  %v44 = vld [vmem:[#allocation2 + $0x30] sm:$0xff]
  %v45 = vld [vmem:[#allocation2 + $0x38] sm:$0xff]
  %v46 = vld [vmem:[#allocation2 + $0x40] sm:$0xff]
  %v47 = vld [vmem:[#allocation2 + $0x48] sm:$0xff]
  %v48 = vld [vmem:[#allocation2 + $0x50] sm:$0xff]
  %v49 = vld [vmem:[#allocation2 + $0x58] sm:$0xff]
  %v50 = vld [vmem:[#allocation2 + $0x60] sm:$0xff]
  %v51 = vld [vmem:[#allocation2 + $0x68] sm:$0xff]
  %v52 = vld [vmem:[#allocation2 + $0x70] sm:$0xff]
  %v53 = vld [vmem:[#allocation2 + $0x78] sm:$0xff]
  %v54 = vld [vmem:[%s0] sm:$0xf]
  %v55 = vld [vmem:[%s0 + $0x4] sm:$0xf]
  %v56 = vld [vmem:[%s0 + $0x8] sm:$0xf]
  %v57 = vld [vmem:[%s0 + $0xc] sm:$0xf]
  %v58 = vld [vmem:[%s0 + $0x10] sm:$0xf]
  %v59 = vld [vmem:[%s0 + $0x14] sm:$0xf]
  %v60 = vld [vmem:[%s0 + $0x18] sm:$0xf]
  %v61 = vld [vmem:[%s0 + $0x1c] sm:$0xf]
  %v62 = vld [vmem:[%s0 + $0x20] sm:$0xf]
  %v63 = vld [vmem:[%s0 + $0x24] sm:$0xf]
  %v64 = vld [vmem:[%s0 + $0x28] sm:$0xf]
  %v65 = vld [vmem:[%s0 + $0x2c] sm:$0xf]
  %v66 = vld [vmem:[%s0 + $0x30] sm:$0xf]
  %v67 = vld [vmem:[%s0 + $0x34] sm:$0xf]
  %v68 = vld [vmem:[%s0 + $0x38] sm:$0xf]
  %v69 = vld [vmem:[%s0 + $0x3c] sm:$0xf]
  %v70 = vld [vmem:[%s1] sm:$0xf]
  %v71 = vld [vmem:[%s1 + $0x4] sm:$0xf]
  %v72 = vld [vmem:[%s1 + $0x8] sm:$0xf]
  %v73 = vld [vmem:[%s1 + $0xc] sm:$0xf]
  %v74 = vld [vmem:[%s1 + $0x10] sm:$0xf]
  %v75 = vld [vmem:[%s1 + $0x14] sm:$0xf]
  %v76 = vld [vmem:[%s1 + $0x18] sm:$0xf]
  %v77 = vld [vmem:[%s1 + $0x1c] sm:$0xf]
  %v78 = vld [vmem:[%s1 + $0x20] sm:$0xf]
  %v79 = vld [vmem:[%s1 + $0x24] sm:$0xf]
  %v80 = vld [vmem:[%s1 + $0x28] sm:$0xf]
  %v81 = vld [vmem:[%s1 + $0x2c] sm:$0xf]
  %v82 = vld [vmem:[%s1 + $0x30] sm:$0xf]
  %v83 = vld [vmem:[%s1 + $0x34] sm:$0xf]
  %v84 = vld [vmem:[%s1 + $0x38] sm:$0xf]
  %v85 = vld [vmem:[%s1 + $0x3c] sm:$0xf]
  %v102 = vunpack.c.l.b16 %v54
  %v103 = vunpack.c.l.b16 %v55
  %v104 = vunpack.c.l.b16 %v56
  %v105 = vunpack.c.l.b16 %v57
  %v106 = vunpack.c.l.b16 %v58
  %v107 = vunpack.c.l.b16 %v59
  %v108 = vunpack.c.l.b16 %v60
  %v109 = vunpack.c.l.b16 %v61
  %v110 = vunpack.c.l.b16 %v62
  %v111 = vunpack.c.l.b16 %v63
  %v112 = vunpack.c.l.b16 %v64
  %v113 = vunpack.c.l.b16 %v65
  %v114 = vunpack.c.l.b16 %v66
  %v115 = vunpack.c.l.b16 %v67
  %v116 = vunpack.c.l.b16 %v68
  %v117 = vunpack.c.l.b16 %v69
  %v118 = vpack.c.b16 %v103, %v102
  %v119 = vpack.c.b16 %v105, %v104
  %v120 = vpack.c.b16 %v107, %v106
  %v121 = vpack.c.b16 %v109, %v108
  %v122 = vpack.c.b16 %v111, %v110
  %v123 = vpack.c.b16 %v113, %v112
  %v124 = vpack.c.b16 %v115, %v114
  %v125 = vpack.c.b16 %v117, %v116
  %v150 = vunpack.c.l.b16 %v70
  %v151 = vunpack.c.l.b16 %v71
  %v152 = vunpack.c.l.b16 %v72
  %v153 = vunpack.c.l.b16 %v73
  %v154 = vunpack.c.l.b16 %v74
  %v155 = vunpack.c.l.b16 %v75
  %v156 = vunpack.c.l.b16 %v76
  %v157 = vunpack.c.l.b16 %v77
  %v158 = vunpack.c.l.b16 %v78
  %v159 = vunpack.c.l.b16 %v79
  %v160 = vunpack.c.l.b16 %v80
  %v161 = vunpack.c.l.b16 %v81
  %v162 = vunpack.c.l.b16 %v82
  %v163 = vunpack.c.l.b16 %v83
  %v164 = vunpack.c.l.b16 %v84
  %v165 = vunpack.c.l.b16 %v85
  %v166 = vpack.c.b16 %v151, %v150
  %v167 = vpack.c.b16 %v153, %v152
  %v168 = vpack.c.b16 %v155, %v154
  %v169 = vpack.c.b16 %v157, %v156
  %v170 = vpack.c.b16 %v159, %v158
  %v171 = vpack.c.b16 %v161, %v160
  %v172 = vpack.c.b16 %v163, %v162
  %v173 = vpack.c.b16 %v165, %v164
  %182 = vmatprep.subr.bf16.mxu0 0
  %183 = vmatpush1.bf16.msra.mxu0 %v166
  %184 = vmatprep.subr.bf16.mxu0 0
  %185 = vmatpush1.bf16.msra.mxu0 %v167
  %186 = vmatprep.subr.bf16.mxu0 0
  %187 = vmatpush1.bf16.msra.mxu0 %v168
  %188 = vmatprep.subr.bf16.mxu0 0
  %189 = vmatpush1.bf16.msra.mxu0 %v169
  %190 = vmatprep.subr.bf16.mxu0 0
  %191 = vmatpush1.bf16.msra.mxu0 %v170
  %192 = vmatprep.subr.bf16.mxu0 0
  %193 = vmatpush1.bf16.msra.mxu0 %v171
  %194 = vmatprep.subr.bf16.mxu0 0
  %195 = vmatpush1.bf16.msra.mxu0 %v172
  %196 = vmatprep.subr.bf16.mxu0 0
  %197 = vmatpush1.bf16.msra.mxu0 %v173
  %198 = vmatprep.subr.bf16.mxu0 0
  %199 = vmatpush1.bf16.msra.mxu0 0
  %200 = vmatprep.subr.bf16.mxu0 0
  %201 = vmatpush1.bf16.msra.mxu0 0
  %202 = vmatprep.subr.bf16.mxu0 0
  %203 = vmatpush1.bf16.msra.mxu0 0
  %204 = vmatprep.subr.bf16.mxu0 0
  %205 = vmatpush1.bf16.msra.mxu0 0
  %206 = vmatprep.subr.bf16.mxu0 0
  %207 = vmatpush1.bf16.msra.mxu0 0
  %208 = vmatprep.subr.bf16.mxu0 0
  %209 = vmatpush1.bf16.msra.mxu0 0
  %210 = vmatprep.subr.bf16.mxu0 0
  %211 = vmatpush1.bf16.msra.mxu0 0
  %212 = vmatprep.subr.bf16.mxu0 0
  %213 = vmatpush1.bf16.msra.mxu0 0
  %214 = vmatprep.mubr.bf16.mxu0 0
  %215 = vmatmul.mubr.bf16.gmra.mrb[0].mxu0 %v118
  %v216 = vpop.f32.mrb[0].mxu0
  %v217 = vadd.f32 0.0, %v216
  %v218 = vpop.f32.mrb[0].mxu0
  %v219 = vpop.f32.mrb[0].mxu0
  %v220 = vadd.f32 0.0, %v219
  %v221 = vpop.f32.mrb[0].mxu0
  %222 = vmatprep.mubr.bf16.mxu0 0
  %223 = vmatmul.mubr.bf16.gmra.mrb[0].mxu0 %v119
  %v224 = vpop.f32.mrb[0].mxu0
  %v225 = vadd.f32 0.0, %v224
  %v226 = vpop.f32.mrb[0].mxu0
  %v227 = vpop.f32.mrb[0].mxu0
  %v228 = vadd.f32 0.0, %v227
  %v229 = vpop.f32.mrb[0].mxu0
  %230 = vmatprep.mubr.bf16.mxu0 0
  %231 = vmatmul.mubr.bf16.gmra.mrb[0].mxu0 %v120
  %v232 = vpop.f32.mrb[0].mxu0
  %v233 = vadd.f32 0.0, %v232
  %v234 = vpop.f32.mrb[0].mxu0
  %v235 = vpop.f32.mrb[0].mxu0
  %v236 = vadd.f32 0.0, %v235
  %v237 = vpop.f32.mrb[0].mxu0
  %238 = vmatprep.mubr.bf16.mxu0 0
  %239 = vmatmul.mubr.bf16.gmra.mrb[0].mxu0 %v121
  %v240 = vpop.f32.mrb[0].mxu0
  %v241 = vadd.f32 0.0, %v240
  %v242 = vpop.f32.mrb[0].mxu0
  %v243 = vpop.f32.mrb[0].mxu0
  %v244 = vadd.f32 0.0, %v243
  %v245 = vpop.f32.mrb[0].mxu0
  %246 = vmatprep.mubr.bf16.mxu0 0
  %247 = vmatmul.mubr.bf16.gmra.mrb[0].mxu0 %v122
  %v248 = vpop.f32.mrb[0].mxu0
  %v249 = vadd.f32 0.0, %v248
  %v250 = vpop.f32.mrb[0].mxu0
  %v251 = vpop.f32.mrb[0].mxu0
  %v252 = vadd.f32 0.0, %v251
  %v253 = vpop.f32.mrb[0].mxu0
  %254 = vmatprep.mubr.bf16.mxu0 0
  %255 = vmatmul.mubr.bf16.gmra.mrb[0].mxu0 %v123
  %v256 = vpop.f32.mrb[0].mxu0
  %v257 = vadd.f32 0.0, %v256
  %v258 = vpop.f32.mrb[0].mxu0
  %v259 = vpop.f32.mrb[0].mxu0
  %v260 = vadd.f32 0.0, %v259
  %v261 = vpop.f32.mrb[0].mxu0
  %262 = vmatprep.mubr.bf16.mxu0 0
  %263 = vmatmul.mubr.bf16.gmra.mrb[0].mxu0 %v124
  %v264 = vpop.f32.mrb[0].mxu0
  %v265 = vadd.f32 0.0, %v264
  %v266 = vpop.f32.mrb[0].mxu0
  %v267 = vpop.f32.mrb[0].mxu0
  %v268 = vadd.f32 0.0, %v267
  %v269 = vpop.f32.mrb[0].mxu0
  %270 = vmatprep.mubr.bf16.mxu0 0
  %271 = vmatmul.mubr.bf16.gmra.mrb[0].mxu0 %v125
  %v272 = vpop.f32.mrb[0].mxu0
  %v273 = vadd.f32 0.0, %v272
  %v274 = vpop.f32.mrb[0].mxu0
  %v275 = vpop.f32.mrb[0].mxu0
  %v276 = vadd.f32 0.0, %v275
  %v277 = vpop.f32.mrb[0].mxu0
  %278 = vdwg.mxu0
  %v279 = vadd.f32 %v38, %v217
  %v280 = vadd.f32 %v39, %v220
  %v281 = vadd.f32 %v40, %v225
  %v282 = vadd.f32 %v41, %v228
  %v283 = vadd.f32 %v42, %v233
  %v284 = vadd.f32 %v43, %v236
  %v285 = vadd.f32 %v44, %v241
  %v286 = vadd.f32 %v45, %v244
  %v287 = vadd.f32 %v46, %v249
  %v288 = vadd.f32 %v47, %v252
  %v289 = vadd.f32 %v48, %v257
  %v290 = vadd.f32 %v49, %v260
  %v291 = vadd.f32 %v50, %v265
  %v292 = vadd.f32 %v51, %v268
  %v293 = vadd.f32 %v52, %v273
  %v294 = vadd.f32 %v53, %v276
  %295 = vst [vmem:[#allocation2] sm:$0xff] %v279
  %296 = vst [vmem:[#allocation2 + $0x8] sm:$0xff] %v280
  %297 = vst [vmem:[#allocation2 + $0x10] sm:$0xff] %v281
  %298 = vst [vmem:[#allocation2 + $0x18] sm:$0xff] %v282
  %299 = vst [vmem:[#allocation2 + $0x20] sm:$0xff] %v283
  %300 = vst [vmem:[#allocation2 + $0x28] sm:$0xff] %v284
  %301 = vst [vmem:[#allocation2 + $0x30] sm:$0xff] %v285
  %302 = vst [vmem:[#allocation2 + $0x38] sm:$0xff] %v286
  %303 = vst [vmem:[#allocation2 + $0x40] sm:$0xff] %v287
  %304 = vst [vmem:[#allocation2 + $0x48] sm:$0xff] %v288
  %305 = vst [vmem:[#allocation2 + $0x50] sm:$0xff] %v289
  %306 = vst [vmem:[#allocation2 + $0x58] sm:$0xff] %v290
  %307 = vst [vmem:[#allocation2 + $0x60] sm:$0xff] %v291
  %308 = vst [vmem:[#allocation2 + $0x68] sm:$0xff] %v292
  %309 = vst [vmem:[#allocation2 + $0x70] sm:$0xff] %v293
  %310 = vst [vmem:[#allocation2 + $0x78] sm:$0xff] %v294
  // Predicated region
  $region22: #{graphsage_link_predictor.7} parent=0 // pred_check
    %p311 = pneg %p18
  $region23: #{graphsage_link_predictor.7} parent=0 // pred_check_branch
    %313 = sbr.rel (%p311) target = $region25
  $region24: #{graphsage_link_predictor.7} parent=0 // pred_region
    %v314 = vld [vmem:[#allocation2] sm:$0xff]
    %v315 = vld [vmem:[#allocation2 + $0x8] sm:$0xff]
    %v316 = vld [vmem:[#allocation2 + $0x10] sm:$0xff]
    %v317 = vld [vmem:[#allocation2 + $0x18] sm:$0xff]
    %v318 = vld [vmem:[#allocation2 + $0x20] sm:$0xff]
    %v319 = vld [vmem:[#allocation2 + $0x28] sm:$0xff]
    %v320 = vld [vmem:[#allocation2 + $0x30] sm:$0xff]
    %v321 = vld [vmem:[#allocation2 + $0x38] sm:$0xff]
    %v322 = vld [vmem:[#allocation2 + $0x40] sm:$0xff]
    %v323 = vld [vmem:[#allocation2 + $0x48] sm:$0xff]
    %v324 = vld [vmem:[#allocation2 + $0x50] sm:$0xff]
    %v325 = vld [vmem:[#allocation2 + $0x58] sm:$0xff]
    %v326 = vld [vmem:[#allocation2 + $0x60] sm:$0xff]
    %v327 = vld [vmem:[#allocation2 + $0x68] sm:$0xff]
    %v328 = vld [vmem:[#allocation2 + $0x70] sm:$0xff]
    %v329 = vld [vmem:[#allocation2 + $0x78] sm:$0xff]
    %v330 = vld [vmem:[%s2] sm:$0xff]
    %v331 = vld [vmem:[%s2 + $0x8] sm:$0xff]
    %v332 = vld [vmem:[%s2 + $0x10] sm:$0xff]
    %v333 = vld [vmem:[%s2 + $0x18] sm:$0xff]
    %v334 = vld [vmem:[%s2 + $0x20] sm:$0xff]
    %v335 = vld [vmem:[%s2 + $0x28] sm:$0xff]
    %v336 = vld [vmem:[%s2 + $0x30] sm:$0xff]
    %v337 = vld [vmem:[%s2 + $0x38] sm:$0xff]
    %v338 = vld [vmem:[%s2 + $0x40] sm:$0xff]
    %v339 = vld [vmem:[%s2 + $0x48] sm:$0xff]
    %v340 = vld [vmem:[%s2 + $0x50] sm:$0xff]
    %v341 = vld [vmem:[%s2 + $0x58] sm:$0xff]
    %v342 = vld [vmem:[%s2 + $0x60] sm:$0xff]
    %v343 = vld [vmem:[%s2 + $0x68] sm:$0xff]
    %v344 = vld [vmem:[%s2 + $0x70] sm:$0xff]
    %v345 = vld [vmem:[%s2 + $0x78] sm:$0xff]
    %v346 = vadd.f32 %v314, %v330
    %v347 = vadd.f32 %v315, %v331
    %v348 = vadd.f32 %v316, %v332
    %v349 = vadd.f32 %v317, %v333
    %v350 = vadd.f32 %v318, %v334
    %v351 = vadd.f32 %v319, %v335
    %v352 = vadd.f32 %v320, %v336
    %v353 = vadd.f32 %v321, %v337
    %v354 = vadd.f32 %v322, %v338
    %v355 = vadd.f32 %v323, %v339
    %v356 = vadd.f32 %v324, %v340
    %v357 = vadd.f32 %v325, %v341
    %v358 = vadd.f32 %v326, %v342
    %v359 = vadd.f32 %v327, %v343
    %v360 = vadd.f32 %v328, %v344
    %v361 = vadd.f32 %v329, %v345
    %v362 = vld [vmem:[%s3] sm:$0x1]
    %v364 = vlaneseq
    %v365 = vshrl.u32 %v364, 7
    %v366 = vsub.s32 0, %v365
    %v367 = vrot.slane %v362, %v366
    %v369 = vadd.f32 %v346, %v367
    %v370 = vadd.f32 %v347, %v367
    %v371 = vadd.f32 %v348, %v367
    %v372 = vadd.f32 %v349, %v367
    %v373 = vadd.f32 %v350, %v367
    %v374 = vadd.f32 %v351, %v367
    %v375 = vadd.f32 %v352, %v367
    %v376 = vadd.f32 %v353, %v367
    %v377 = vadd.f32 %v354, %v367
    %v378 = vadd.f32 %v355, %v367
    %v379 = vadd.f32 %v356, %v367
    %v380 = vadd.f32 %v357, %v367
    %v381 = vadd.f32 %v358, %v367
    %v382 = vadd.f32 %v359, %v367
    %v383 = vadd.f32 %v360, %v367
    %v384 = vadd.f32 %v361, %v367
    %v385 = vmax.f32 %v369, 0.0
    %v386 = vmax.f32 %v370, 0.0
    %v387 = vmax.f32 %v371, 0.0
    %v388 = vmax.f32 %v372, 0.0
    %v389 = vmax.f32 %v373, 0.0
    %v390 = vmax.f32 %v374, 0.0
    %v391 = vmax.f32 %v375, 0.0
    %v392 = vmax.f32 %v376, 0.0
    %v393 = vmax.f32 %v377, 0.0
    %v394 = vmax.f32 %v378, 0.0
    %v395 = vmax.f32 %v379, 0.0
    %v396 = vmax.f32 %v380, 0.0
    %v397 = vmax.f32 %v381, 0.0
    %v398 = vmax.f32 %v382, 0.0
    %v399 = vmax.f32 %v383, 0.0
    %v400 = vmax.f32 %v384, 0.0
    %v401 = vpack.c.bf16 %v386, %v385
    %v402 = vpack.c.bf16 %v388, %v387
    %v403 = vpack.c.bf16 %v390, %v389
    %v404 = vpack.c.bf16 %v392, %v391
    %v405 = vpack.c.bf16 %v394, %v393
    %v406 = vpack.c.bf16 %v396, %v395
    %v407 = vpack.c.bf16 %v398, %v397
    %v408 = vpack.c.bf16 %v400, %v399
    %v417 = vunpack.c.l.b16 %v401
    %v418 = vunpack.c.h.b16 %v401
    %v419 = vunpack.c.l.b16 %v402
    %v420 = vunpack.c.h.b16 %v402
    %v421 = vunpack.c.l.b16 %v403
    %v422 = vunpack.c.h.b16 %v403
    %v423 = vunpack.c.l.b16 %v404
    %v424 = vunpack.c.h.b16 %v404
    %v425 = vunpack.c.l.b16 %v405
    %v426 = vunpack.c.h.b16 %v405
    %v427 = vunpack.c.l.b16 %v406
    %v428 = vunpack.c.h.b16 %v406
    %v429 = vunpack.c.l.b16 %v407
    %v430 = vunpack.c.h.b16 %v407
    %v431 = vunpack.c.l.b16 %v408
    %v432 = vunpack.c.h.b16 %v408
    %v433 = vpack.c.b16 %v417, %v417
    %v434 = vpack.c.b16 %v418, %v418
    %v435 = vpack.c.b16 %v419, %v419
    %v436 = vpack.c.b16 %v420, %v420
    %v437 = vpack.c.b16 %v421, %v421
    %v438 = vpack.c.b16 %v422, %v422
    %v439 = vpack.c.b16 %v423, %v423
    %v440 = vpack.c.b16 %v424, %v424
    %v441 = vpack.c.b16 %v425, %v425
    %v442 = vpack.c.b16 %v426, %v426
    %v443 = vpack.c.b16 %v427, %v427
    %v444 = vpack.c.b16 %v428, %v428
    %v445 = vpack.c.b16 %v429, %v429
    %v446 = vpack.c.b16 %v430, %v430
    %v447 = vpack.c.b16 %v431, %v431
    %v448 = vpack.c.b16 %v432, %v432
    %465 = vst [vmem:[%s4] sm:$0xf] %v433
    %466 = vst [vmem:[%s4 + $0x4] sm:$0xf] %v434
    %467 = vst [vmem:[%s4 + $0x8] sm:$0xf] %v435
    %468 = vst [vmem:[%s4 + $0xc] sm:$0xf] %v436
    %469 = vst [vmem:[%s4 + $0x10] sm:$0xf] %v437
    %470 = vst [vmem:[%s4 + $0x14] sm:$0xf] %v438
    %471 = vst [vmem:[%s4 + $0x18] sm:$0xf] %v439
    %472 = vst [vmem:[%s4 + $0x1c] sm:$0xf] %v440
    %473 = vst [vmem:[%s4 + $0x20] sm:$0xf] %v441
    %474 = vst [vmem:[%s4 + $0x24] sm:$0xf] %v442
    %475 = vst [vmem:[%s4 + $0x28] sm:$0xf] %v443
    %476 = vst [vmem:[%s4 + $0x2c] sm:$0xf] %v444
    %477 = vst [vmem:[%s4 + $0x30] sm:$0xf] %v445
    %478 = vst [vmem:[%s4 + $0x34] sm:$0xf] %v446
    %479 = vst [vmem:[%s4 + $0x38] sm:$0xf] %v447
    %480 = vst [vmem:[%s4 + $0x3c] sm:$0xf] %v448
  $region25: #{graphsage_link_predictor.7} parent=0 // pred_fallthru
    _
  // Predicated region
  $region26: #{graphsage_link_predictor.7} parent=0 // pred_check
    _
  $region27: #{graphsage_link_predictor.7} parent=0 // pred_check_branch
    %482 = sbr.rel (0) target = $region29
  $region28: #{graphsage_link_predictor.7} parent=0 // pred_region
    _
  $region29: #{graphsage_link_predictor.7} parent=0 // pred_fallthru
    _
  // Predicated region
  $region30: #{graphsage_link_predictor.7} parent=0 // pred_check
    _
  $region31: #{graphsage_link_predictor.7} parent=0 // pred_check_branch
    %484 = sbr.rel (0) target = $region33
  $region32: #{graphsage_link_predictor.7} parent=0 // pred_region
    _
  $region33: #{graphsage_link_predictor.7} parent=0 // pred_fallthru
    _

// kernel: graphsage_link_predictor.9
$region0: #{graphsage_link_predictor.9}
  #allocation0 [shape = 'u32[]', space=smem, size = 0x4, offset = 0x4, fixed_abs, tag = 'smem constant byte address 0x4 - core index']
  #allocation1 [shape = 'u32[144,128]{1,0:T(1,128)}', space=vmem, size = 0x12000, scoped, tag = 'internal scratch']
  #allocation2 [shape = 'f32[128,128]{1,0:T(8,128)}', space=vmem, size = 0x10000, scoped, tag = 'scratch operand']
  %s0 = inlined_call_operand.vmem [shape: bf16[128,128], index: 0, kind: input, shape index: {}]
  %s1 = inlined_call_operand.vmem [shape: bf16[128,128], index: 1, kind: input, shape index: {}]
  %s2 = inlined_call_operand.vmem [shape: f32[128,128], index: 2, kind: input, shape index: {}]
  %s3 = inlined_call_operand.vmem [shape: f32[1,128], index: 3, kind: input, shape index: {}]
  %s4 = inlined_call_operand.vmem [shape: f32[128,128], index: 4, kind: output, shape index: {}]
  %s5 = sld [smem:[#allocation0]]
  $region34: #{graphsage_link_predictor.9} parent=0
    _
  %s7 = ssub.s32 1, %s5
  %s8 = scalar_select 0, %s7, %s5
  // Predicated region
  $region2: #{graphsage_link_predictor.9} parent=0 // pred_check
    _
  $region3: #{graphsage_link_predictor.9} parent=0 // pred_check_branch
    %10 = sbr.rel (0) target = $region5
  $region4: #{graphsage_link_predictor.9} parent=0 // pred_region
    _
  $region5: #{graphsage_link_predictor.9} parent=0 // pred_fallthru
    _
  // Predicated region
  $region6: #{graphsage_link_predictor.9} parent=0 // pred_check
    _
  $region7: #{graphsage_link_predictor.9} parent=0 // pred_check_branch
    %12 = sbr.rel (0) target = $region9
  $region8: #{graphsage_link_predictor.9} parent=0 // pred_region
    _
  $region9: #{graphsage_link_predictor.9} parent=0 // pred_fallthru
    _
  // Predicated region
  $region10: #{graphsage_link_predictor.9} parent=0 // pred_check
    _
  $region11: #{graphsage_link_predictor.9} parent=0 // pred_check_branch
    %14 = sbr.rel (0) target = $region13
  $region12: #{graphsage_link_predictor.9} parent=0 // pred_region
    _
  $region13: #{graphsage_link_predictor.9} parent=0 // pred_fallthru
    _
  // Predicated region
  $region14: #{graphsage_link_predictor.9} parent=0 // pred_check
    _
  $region15: #{graphsage_link_predictor.9} parent=0 // pred_check_branch
    %16 = sbr.rel (0) target = $region17
  $region16: #{graphsage_link_predictor.9} parent=0 // pred_region
    _
  $region17: #{graphsage_link_predictor.9} parent=0 // pred_fallthru
    _
  %p18 = scmp.eq.s32.totalorder 0, 0
  // Predicated region
  $region18: #{graphsage_link_predictor.9} parent=0 // pred_check
    %p19 = pneg %p18
  $region19: #{graphsage_link_predictor.9} parent=0 // pred_check_branch
    %21 = sbr.rel (%p19) target = $region21
  $region20: #{graphsage_link_predictor.9} parent=0 // pred_region
    %22 = vst [vmem:[#allocation2] sm:$0xff] 0.0
    %23 = vst [vmem:[#allocation2 + $0x8] sm:$0xff] 0.0
    %24 = vst [vmem:[#allocation2 + $0x10] sm:$0xff] 0.0
    %25 = vst [vmem:[#allocation2 + $0x18] sm:$0xff] 0.0
    %26 = vst [vmem:[#allocation2 + $0x20] sm:$0xff] 0.0
    %27 = vst [vmem:[#allocation2 + $0x28] sm:$0xff] 0.0
    %28 = vst [vmem:[#allocation2 + $0x30] sm:$0xff] 0.0
    %29 = vst [vmem:[#allocation2 + $0x38] sm:$0xff] 0.0
    %30 = vst [vmem:[#allocation2 + $0x40] sm:$0xff] 0.0
    %31 = vst [vmem:[#allocation2 + $0x48] sm:$0xff] 0.0
    %32 = vst [vmem:[#allocation2 + $0x50] sm:$0xff] 0.0
    %33 = vst [vmem:[#allocation2 + $0x58] sm:$0xff] 0.0
    %34 = vst [vmem:[#allocation2 + $0x60] sm:$0xff] 0.0
    %35 = vst [vmem:[#allocation2 + $0x68] sm:$0xff] 0.0
    %36 = vst [vmem:[#allocation2 + $0x70] sm:$0xff] 0.0
    %37 = vst [vmem:[#allocation2 + $0x78] sm:$0xff] 0.0
  $region21: #{graphsage_link_predictor.9} parent=0 // pred_fallthru
    _
  %v38 = vld [vmem:[#allocation2] sm:$0xff]
  %v39 = vld [vmem:[#allocation2 + $0x8] sm:$0xff]
  %v40 = vld [vmem:[#allocation2 + $0x10] sm:$0xff]
  %v41 = vld [vmem:[#allocation2 + $0x18] sm:$0xff]
  %v42 = vld [vmem:[#allocation2 + $0x20] sm:$0xff]
  %v43 = vld [vmem:[#allocation2 + $0x28] sm:$0xff]
  %v44 = vld [vmem:[#allocation2 + $0x30] sm:$0xff]
  %v45 = vld [vmem:[#allocation2 + $0x38] sm:$0xff]
  %v46 = vld [vmem:[#allocation2 + $0x40] sm:$0xff]
  %v47 = vld [vmem:[#allocation2 + $0x48] sm:$0xff]
  %v48 = vld [vmem:[#allocation2 + $0x50] sm:$0xff]
  %v49 = vld [vmem:[#allocation2 + $0x58] sm:$0xff]
  %v50 = vld [vmem:[#allocation2 + $0x60] sm:$0xff]
  %v51 = vld [vmem:[#allocation2 + $0x68] sm:$0xff]
  %v52 = vld [vmem:[#allocation2 + $0x70] sm:$0xff]
  %v53 = vld [vmem:[#allocation2 + $0x78] sm:$0xff]
  %v54 = vld [vmem:[%s0] sm:$0xf]
  %v55 = vld [vmem:[%s0 + $0x4] sm:$0xf]
  %v56 = vld [vmem:[%s0 + $0x8] sm:$0xf]
  %v57 = vld [vmem:[%s0 + $0xc] sm:$0xf]
  %v58 = vld [vmem:[%s0 + $0x10] sm:$0xf]
  %v59 = vld [vmem:[%s0 + $0x14] sm:$0xf]
  %v60 = vld [vmem:[%s0 + $0x18] sm:$0xf]
  %v61 = vld [vmem:[%s0 + $0x1c] sm:$0xf]
  %v62 = vld [vmem:[%s0 + $0x20] sm:$0xf]
  %v63 = vld [vmem:[%s0 + $0x24] sm:$0xf]
  %v64 = vld [vmem:[%s0 + $0x28] sm:$0xf]
  %v65 = vld [vmem:[%s0 + $0x2c] sm:$0xf]
  %v66 = vld [vmem:[%s0 + $0x30] sm:$0xf]
  %v67 = vld [vmem:[%s0 + $0x34] sm:$0xf]
  %v68 = vld [vmem:[%s0 + $0x38] sm:$0xf]
  %v69 = vld [vmem:[%s0 + $0x3c] sm:$0xf]
  %v70 = vld [vmem:[%s1] sm:$0xf]
  %v71 = vld [vmem:[%s1 + $0x4] sm:$0xf]
  %v72 = vld [vmem:[%s1 + $0x8] sm:$0xf]
  %v73 = vld [vmem:[%s1 + $0xc] sm:$0xf]
  %v74 = vld [vmem:[%s1 + $0x10] sm:$0xf]
  %v75 = vld [vmem:[%s1 + $0x14] sm:$0xf]
  %v76 = vld [vmem:[%s1 + $0x18] sm:$0xf]
  %v77 = vld [vmem:[%s1 + $0x1c] sm:$0xf]
  %v78 = vld [vmem:[%s1 + $0x20] sm:$0xf]
  %v79 = vld [vmem:[%s1 + $0x24] sm:$0xf]
  %v80 = vld [vmem:[%s1 + $0x28] sm:$0xf]
  %v81 = vld [vmem:[%s1 + $0x2c] sm:$0xf]
  %v82 = vld [vmem:[%s1 + $0x30] sm:$0xf]
  %v83 = vld [vmem:[%s1 + $0x34] sm:$0xf]
  %v84 = vld [vmem:[%s1 + $0x38] sm:$0xf]
  %v85 = vld [vmem:[%s1 + $0x3c] sm:$0xf]
  %v102 = vunpack.c.l.b16 %v54
  %v103 = vunpack.c.l.b16 %v55
  %v104 = vunpack.c.l.b16 %v56
  %v105 = vunpack.c.l.b16 %v57
  %v106 = vunpack.c.l.b16 %v58
  %v107 = vunpack.c.l.b16 %v59
  %v108 = vunpack.c.l.b16 %v60
  %v109 = vunpack.c.l.b16 %v61
  %v110 = vunpack.c.l.b16 %v62
  %v111 = vunpack.c.l.b16 %v63
  %v112 = vunpack.c.l.b16 %v64
  %v113 = vunpack.c.l.b16 %v65
  %v114 = vunpack.c.l.b16 %v66
  %v115 = vunpack.c.l.b16 %v67
  %v116 = vunpack.c.l.b16 %v68
  %v117 = vunpack.c.l.b16 %v69
  %v118 = vpack.c.b16 %v103, %v102
  %v119 = vpack.c.b16 %v105, %v104
  %v120 = vpack.c.b16 %v107, %v106
  %v121 = vpack.c.b16 %v109, %v108
  %v122 = vpack.c.b16 %v111, %v110
  %v123 = vpack.c.b16 %v113, %v112
  %v124 = vpack.c.b16 %v115, %v114
  %v125 = vpack.c.b16 %v117, %v116
  %v150 = vunpack.c.l.b16 %v70
  %v151 = vunpack.c.l.b16 %v71
  %v152 = vunpack.c.l.b16 %v72
  %v153 = vunpack.c.l.b16 %v73
  %v154 = vunpack.c.l.b16 %v74
  %v155 = vunpack.c.l.b16 %v75
  %v156 = vunpack.c.l.b16 %v76
  %v157 = vunpack.c.l.b16 %v77
  %v158 = vunpack.c.l.b16 %v78
  %v159 = vunpack.c.l.b16 %v79
  %v160 = vunpack.c.l.b16 %v80
  %v161 = vunpack.c.l.b16 %v81
  %v162 = vunpack.c.l.b16 %v82
  %v163 = vunpack.c.l.b16 %v83
  %v164 = vunpack.c.l.b16 %v84
  %v165 = vunpack.c.l.b16 %v85
  %v166 = vpack.c.b16 %v151, %v150
  %v167 = vpack.c.b16 %v153, %v152
  %v168 = vpack.c.b16 %v155, %v154
  %v169 = vpack.c.b16 %v157, %v156
  %v170 = vpack.c.b16 %v159, %v158
  %v171 = vpack.c.b16 %v161, %v160
  %v172 = vpack.c.b16 %v163, %v162
  %v173 = vpack.c.b16 %v165, %v164
  %182 = vmatprep.subr.bf16.mxu0 0
  %183 = vmatpush1.bf16.msra.mxu0 %v166
  %184 = vmatprep.subr.bf16.mxu0 0
  %185 = vmatpush1.bf16.msra.mxu0 %v167
  %186 = vmatprep.subr.bf16.mxu0 0
  %187 = vmatpush1.bf16.msra.mxu0 %v168
  %188 = vmatprep.subr.bf16.mxu0 0
  %189 = vmatpush1.bf16.msra.mxu0 %v169
  %190 = vmatprep.subr.bf16.mxu0 0
  %191 = vmatpush1.bf16.msra.mxu0 %v170
  %192 = vmatprep.subr.bf16.mxu0 0
  %193 = vmatpush1.bf16.msra.mxu0 %v171
  %194 = vmatprep.subr.bf16.mxu0 0
  %195 = vmatpush1.bf16.msra.mxu0 %v172
  %196 = vmatprep.subr.bf16.mxu0 0
  %197 = vmatpush1.bf16.msra.mxu0 %v173
  %198 = vmatprep.subr.bf16.mxu0 0
  %199 = vmatpush1.bf16.msra.mxu0 0
  %200 = vmatprep.subr.bf16.mxu0 0
  %201 = vmatpush1.bf16.msra.mxu0 0
  %202 = vmatprep.subr.bf16.mxu0 0
  %203 = vmatpush1.bf16.msra.mxu0 0
  %204 = vmatprep.subr.bf16.mxu0 0
  %205 = vmatpush1.bf16.msra.mxu0 0
  %206 = vmatprep.subr.bf16.mxu0 0
  %207 = vmatpush1.bf16.msra.mxu0 0
  %208 = vmatprep.subr.bf16.mxu0 0
  %209 = vmatpush1.bf16.msra.mxu0 0
  %210 = vmatprep.subr.bf16.mxu0 0
  %211 = vmatpush1.bf16.msra.mxu0 0
  %212 = vmatprep.subr.bf16.mxu0 0
  %213 = vmatpush1.bf16.msra.mxu0 0
  %214 = vmatprep.mubr.bf16.mxu0 0
  %215 = vmatmul.mubr.bf16.gmra.mrb[0].mxu0 %v118
  %v216 = vpop.f32.mrb[0].mxu0
  %v217 = vadd.f32 0.0, %v216
  %v218 = vpop.f32.mrb[0].mxu0
  %v219 = vpop.f32.mrb[0].mxu0
  %v220 = vadd.f32 0.0, %v219
  %v221 = vpop.f32.mrb[0].mxu0
  %222 = vmatprep.mubr.bf16.mxu0 0
  %223 = vmatmul.mubr.bf16.gmra.mrb[0].mxu0 %v119
  %v224 = vpop.f32.mrb[0].mxu0
  %v225 = vadd.f32 0.0, %v224
  %v226 = vpop.f32.mrb[0].mxu0
  %v227 = vpop.f32.mrb[0].mxu0
  %v228 = vadd.f32 0.0, %v227
  %v229 = vpop.f32.mrb[0].mxu0
  %230 = vmatprep.mubr.bf16.mxu0 0
  %231 = vmatmul.mubr.bf16.gmra.mrb[0].mxu0 %v120
  %v232 = vpop.f32.mrb[0].mxu0
  %v233 = vadd.f32 0.0, %v232
  %v234 = vpop.f32.mrb[0].mxu0
  %v235 = vpop.f32.mrb[0].mxu0
  %v236 = vadd.f32 0.0, %v235
  %v237 = vpop.f32.mrb[0].mxu0
  %238 = vmatprep.mubr.bf16.mxu0 0
  %239 = vmatmul.mubr.bf16.gmra.mrb[0].mxu0 %v121
  %v240 = vpop.f32.mrb[0].mxu0
  %v241 = vadd.f32 0.0, %v240
  %v242 = vpop.f32.mrb[0].mxu0
  %v243 = vpop.f32.mrb[0].mxu0
  %v244 = vadd.f32 0.0, %v243
  %v245 = vpop.f32.mrb[0].mxu0
  %246 = vmatprep.mubr.bf16.mxu0 0
  %247 = vmatmul.mubr.bf16.gmra.mrb[0].mxu0 %v122
  %v248 = vpop.f32.mrb[0].mxu0
  %v249 = vadd.f32 0.0, %v248
  %v250 = vpop.f32.mrb[0].mxu0
  %v251 = vpop.f32.mrb[0].mxu0
  %v252 = vadd.f32 0.0, %v251
  %v253 = vpop.f32.mrb[0].mxu0
  %254 = vmatprep.mubr.bf16.mxu0 0
  %255 = vmatmul.mubr.bf16.gmra.mrb[0].mxu0 %v123
  %v256 = vpop.f32.mrb[0].mxu0
  %v257 = vadd.f32 0.0, %v256
  %v258 = vpop.f32.mrb[0].mxu0
  %v259 = vpop.f32.mrb[0].mxu0
  %v260 = vadd.f32 0.0, %v259
  %v261 = vpop.f32.mrb[0].mxu0
  %262 = vmatprep.mubr.bf16.mxu0 0
  %263 = vmatmul.mubr.bf16.gmra.mrb[0].mxu0 %v124
  %v264 = vpop.f32.mrb[0].mxu0
  %v265 = vadd.f32 0.0, %v264
  %v266 = vpop.f32.mrb[0].mxu0
  %v267 = vpop.f32.mrb[0].mxu0
  %v268 = vadd.f32 0.0, %v267
  %v269 = vpop.f32.mrb[0].mxu0
  %270 = vmatprep.mubr.bf16.mxu0 0
  %271 = vmatmul.mubr.bf16.gmra.mrb[0].mxu0 %v125
  %v272 = vpop.f32.mrb[0].mxu0
  %v273 = vadd.f32 0.0, %v272
  %v274 = vpop.f32.mrb[0].mxu0
  %v275 = vpop.f32.mrb[0].mxu0
  %v276 = vadd.f32 0.0, %v275
  %v277 = vpop.f32.mrb[0].mxu0
  %278 = vdwg.mxu0
  %v279 = vadd.f32 %v38, %v217
  %v280 = vadd.f32 %v39, %v220
  %v281 = vadd.f32 %v40, %v225
  %v282 = vadd.f32 %v41, %v228
  %v283 = vadd.f32 %v42, %v233
  %v284 = vadd.f32 %v43, %v236
  %v285 = vadd.f32 %v44, %v241
  %v286 = vadd.f32 %v45, %v244
  %v287 = vadd.f32 %v46, %v249
  %v288 = vadd.f32 %v47, %v252
  %v289 = vadd.f32 %v48, %v257
  %v290 = vadd.f32 %v49, %v260
  %v291 = vadd.f32 %v50, %v265
  %v292 = vadd.f32 %v51, %v268
  %v293 = vadd.f32 %v52, %v273
  %v294 = vadd.f32 %v53, %v276
  %295 = vst [vmem:[#allocation2] sm:$0xff] %v279
  %296 = vst [vmem:[#allocation2 + $0x8] sm:$0xff] %v280
  %297 = vst [vmem:[#allocation2 + $0x10] sm:$0xff] %v281
  %298 = vst [vmem:[#allocation2 + $0x18] sm:$0xff] %v282
  %299 = vst [vmem:[#allocation2 + $0x20] sm:$0xff] %v283
  %300 = vst [vmem:[#allocation2 + $0x28] sm:$0xff] %v284
  %301 = vst [vmem:[#allocation2 + $0x30] sm:$0xff] %v285
  %302 = vst [vmem:[#allocation2 + $0x38] sm:$0xff] %v286
  %303 = vst [vmem:[#allocation2 + $0x40] sm:$0xff] %v287
  %304 = vst [vmem:[#allocation2 + $0x48] sm:$0xff] %v288
  %305 = vst [vmem:[#allocation2 + $0x50] sm:$0xff] %v289
  %306 = vst [vmem:[#allocation2 + $0x58] sm:$0xff] %v290
  %307 = vst [vmem:[#allocation2 + $0x60] sm:$0xff] %v291
  %308 = vst [vmem:[#allocation2 + $0x68] sm:$0xff] %v292
  %309 = vst [vmem:[#allocation2 + $0x70] sm:$0xff] %v293
  %310 = vst [vmem:[#allocation2 + $0x78] sm:$0xff] %v294
  // Predicated region
  $region22: #{graphsage_link_predictor.9} parent=0 // pred_check
    %p311 = pneg %p18
  $region23: #{graphsage_link_predictor.9} parent=0 // pred_check_branch
    %313 = sbr.rel (%p311) target = $region25
  $region24: #{graphsage_link_predictor.9} parent=0 // pred_region
    %v314 = vld [vmem:[#allocation2] sm:$0xff]
    %v315 = vld [vmem:[#allocation2 + $0x8] sm:$0xff]
    %v316 = vld [vmem:[#allocation2 + $0x10] sm:$0xff]
    %v317 = vld [vmem:[#allocation2 + $0x18] sm:$0xff]
    %v318 = vld [vmem:[#allocation2 + $0x20] sm:$0xff]
    %v319 = vld [vmem:[#allocation2 + $0x28] sm:$0xff]
    %v320 = vld [vmem:[#allocation2 + $0x30] sm:$0xff]
    %v321 = vld [vmem:[#allocation2 + $0x38] sm:$0xff]
    %v322 = vld [vmem:[#allocation2 + $0x40] sm:$0xff]
    %v323 = vld [vmem:[#allocation2 + $0x48] sm:$0xff]
    %v324 = vld [vmem:[#allocation2 + $0x50] sm:$0xff]
    %v325 = vld [vmem:[#allocation2 + $0x58] sm:$0xff]
    %v326 = vld [vmem:[#allocation2 + $0x60] sm:$0xff]
    %v327 = vld [vmem:[#allocation2 + $0x68] sm:$0xff]
    %v328 = vld [vmem:[#allocation2 + $0x70] sm:$0xff]
    %v329 = vld [vmem:[#allocation2 + $0x78] sm:$0xff]
    %v330 = vld [vmem:[%s2] sm:$0xff]
    %v331 = vld [vmem:[%s2 + $0x8] sm:$0xff]
    %v332 = vld [vmem:[%s2 + $0x10] sm:$0xff]
    %v333 = vld [vmem:[%s2 + $0x18] sm:$0xff]
    %v334 = vld [vmem:[%s2 + $0x20] sm:$0xff]
    %v335 = vld [vmem:[%s2 + $0x28] sm:$0xff]
    %v336 = vld [vmem:[%s2 + $0x30] sm:$0xff]
    %v337 = vld [vmem:[%s2 + $0x38] sm:$0xff]
    %v338 = vld [vmem:[%s2 + $0x40] sm:$0xff]
    %v339 = vld [vmem:[%s2 + $0x48] sm:$0xff]
    %v340 = vld [vmem:[%s2 + $0x50] sm:$0xff]
    %v341 = vld [vmem:[%s2 + $0x58] sm:$0xff]
    %v342 = vld [vmem:[%s2 + $0x60] sm:$0xff]
    %v343 = vld [vmem:[%s2 + $0x68] sm:$0xff]
    %v344 = vld [vmem:[%s2 + $0x70] sm:$0xff]
    %v345 = vld [vmem:[%s2 + $0x78] sm:$0xff]
    %v346 = vadd.f32 %v314, %v330
    %v347 = vadd.f32 %v315, %v331
    %v348 = vadd.f32 %v316, %v332
    %v349 = vadd.f32 %v317, %v333
    %v350 = vadd.f32 %v318, %v334
    %v351 = vadd.f32 %v319, %v335
    %v352 = vadd.f32 %v320, %v336
    %v353 = vadd.f32 %v321, %v337
    %v354 = vadd.f32 %v322, %v338
    %v355 = vadd.f32 %v323, %v339
    %v356 = vadd.f32 %v324, %v340
    %v357 = vadd.f32 %v325, %v341
    %v358 = vadd.f32 %v326, %v342
    %v359 = vadd.f32 %v327, %v343
    %v360 = vadd.f32 %v328, %v344
    %v361 = vadd.f32 %v329, %v345
    %v362 = vld [vmem:[%s3] sm:$0x1]
    %v364 = vlaneseq
    %v365 = vshrl.u32 %v364, 7
    %v366 = vsub.s32 0, %v365
    %v367 = vrot.slane %v362, %v366
    %v369 = vadd.f32 %v346, %v367
    %v370 = vadd.f32 %v347, %v367
    %v371 = vadd.f32 %v348, %v367
    %v372 = vadd.f32 %v349, %v367
    %v373 = vadd.f32 %v350, %v367
    %v374 = vadd.f32 %v351, %v367
    %v375 = vadd.f32 %v352, %v367
    %v376 = vadd.f32 %v353, %v367
    %v377 = vadd.f32 %v354, %v367
    %v378 = vadd.f32 %v355, %v367
    %v379 = vadd.f32 %v356, %v367
    %v380 = vadd.f32 %v357, %v367
    %v381 = vadd.f32 %v358, %v367
    %v382 = vadd.f32 %v359, %v367
    %v383 = vadd.f32 %v360, %v367
    %v384 = vadd.f32 %v361, %v367
    %385 = vst [vmem:[%s4] sm:$0xff] %v369
    %386 = vst [vmem:[%s4 + $0x8] sm:$0xff] %v370
    %387 = vst [vmem:[%s4 + $0x10] sm:$0xff] %v371
    %388 = vst [vmem:[%s4 + $0x18] sm:$0xff] %v372
    %389 = vst [vmem:[%s4 + $0x20] sm:$0xff] %v373
    %390 = vst [vmem:[%s4 + $0x28] sm:$0xff] %v374
    %391 = vst [vmem:[%s4 + $0x30] sm:$0xff] %v375
    %392 = vst [vmem:[%s4 + $0x38] sm:$0xff] %v376
    %393 = vst [vmem:[%s4 + $0x40] sm:$0xff] %v377
    %394 = vst [vmem:[%s4 + $0x48] sm:$0xff] %v378
    %395 = vst [vmem:[%s4 + $0x50] sm:$0xff] %v379
    %396 = vst [vmem:[%s4 + $0x58] sm:$0xff] %v380
    %397 = vst [vmem:[%s4 + $0x60] sm:$0xff] %v381
    %398 = vst [vmem:[%s4 + $0x68] sm:$0xff] %v382
    %399 = vst [vmem:[%s4 + $0x70] sm:$0xff] %v383
    %400 = vst [vmem:[%s4 + $0x78] sm:$0xff] %v384
  $region25: #{graphsage_link_predictor.9} parent=0 // pred_fallthru
    _
  // Predicated region
  $region26: #{graphsage_link_predictor.9} parent=0 // pred_check
    _
  $region27: #{graphsage_link_predictor.9} parent=0 // pred_check_branch
    %402 = sbr.rel (0) target = $region29
  $region28: #{graphsage_link_predictor.9} parent=0 // pred_region
    _
  $region29: #{graphsage_link_predictor.9} parent=0 // pred_fallthru
    _
  // Predicated region
  $region30: #{graphsage_link_predictor.9} parent=0 // pred_check
    _
  $region31: #{graphsage_link_predictor.9} parent=0 // pred_check_branch
    %404 = sbr.rel (0) target = $region33
  $region32: #{graphsage_link_predictor.9} parent=0 // pred_region
    _
  $region33: #{graphsage_link_predictor.9} parent=0 // pred_fallthru
    _

</llo_original>
